<compile_context>
chip_gen: v7x
topology: tpu7x:2x2x1
jax: 0.10.0
libtpu: 0.0.40
codegen_flags: <defaults>
</compile_context>

<pallas_src>
import functools

import jax
import jax.numpy as jnp
from jax.experimental import pallas as pl
from jax.experimental.pallas import tpu as pltpu

_BN_EPS = 1e-5
_VMEM_LIMIT = 32 * 1024 * 1024   # far above what these kernels need; safe on v5e/v6e/v7x


# ---------------------------------------------------------------------------
# Kernel A: ConvTranspose2d(k=2, s=2) as a channels-first matmul over its 4 sub-kernels
# ---------------------------------------------------------------------------
def _lane_tile(n, cap=4096):
    """Spatial (lane) tile: full extent for small maps, else a multiple-of-128 divisor."""
    if n <= cap:
        return n
    for t in range(cap - cap % 128, 127, -128):
        if n % t == 0:
            return t
    return n


def _up_matmul_kernel(x_ref, w_ref, b_ref, o_ref):
    x_bf = x_ref[0].astype(jnp.bfloat16)                                     # (Cin, thw)
    y = jnp.dot(w_ref[...], x_bf, preferred_element_type=jnp.float32) + b_ref[...]
    o_ref[0] = y.astype(o_ref.dtype)


def pallas_up_matmul(x_flat, w_mat, b4):
    """x_flat: (N, Cin, H*W) f32 -> (N, 4*Cout, H*W) bf16, rows ordered (co, kh, kw)."""
    N, Cin, HW = x_flat.shape
    Q = w_mat.shape[0]
    thw = _lane_tile(HW)
    cost = pl.CostEstimate(flops=2 * N * Q * Cin * HW, transcendentals=0,
                           bytes_accessed=4 * N * Cin * HW + 2 * N * Q * HW)
    return pl.pallas_call(
        _up_matmul_kernel,
        out_shape=jax.ShapeDtypeStruct((N, Q, HW), jnp.bfloat16),
        grid=(N, HW // thw),
        in_specs=[pl.BlockSpec((1, Cin, thw), lambda n, h: (n, 0, h)),
                  pl.BlockSpec((Q, Cin), lambda n, h: (0, 0)),
                  pl.BlockSpec((Q, 1), lambda n, h: (0, 0))],
        out_specs=pl.BlockSpec((1, Q, thw), lambda n, h: (n, 0, h)),
        compiler_params=pltpu.CompilerParams(
            dimension_semantics=("parallel", "parallel"),
            vmem_limit_bytes=_VMEM_LIMIT),
        cost_estimate=cost,
    )(x_flat, w_mat, b4.reshape(Q, 1))


def _pixel_shuffle2(y4, Cout, H, W):
    """(N, 4*Cout, H*W) rows ordered (co, kh, kw) -> (N, Cout, 2H, 2W). Plain-JAX layout glue."""
    N = y4.shape[0]
    y = y4.reshape(N, Cout, 2, 2, H, W)
    return y.transpose(0, 1, 4, 2, 5, 3).reshape(N, Cout, 2 * H, 2 * W)


# ---------------------------------------------------------------------------
# Kernel B: fused attention gate + ResidualBlock, channels-first flat-padded layout
# ---------------------------------------------------------------------------
def _att_res_kernel(g_ref, s_ref,
                    wg_ref, bg_ref, wx_ref, bx_ref, wp_ref, bp_ref,
                    w1_ref, b1_ref, w2_ref, b2_ref, wr_ref, br_ref,
                    o_ref, *, swp, sh, sw):
    # g_ref/s_ref: (1, C, Rp) bf16, zero-padded images flattened row-major, Rp = (SH+2)*(SW+2).
    # The 3x3-conv tap (kh, kw) of the centre at flat index ctr + p lives at flat index
    # ctr + p + (kh-1)*swp + (kw-1): every tap is a static lane slice.
    f32, bf16 = jnp.float32, jnp.bfloat16
    C = g_ref.shape[1]
    rp = g_ref.shape[2]
    ctr = swp + 1                       # flat offset of the first conv centre (pixel (1,1))
    d = rp - 2 * ctr                    # contiguous flat range covering all interior centres

    g_bf = g_ref[0]                     # (C, Rp) bf16
    s_bf = s_ref[0]                     # (C, Rp) bf16

    # --- attention gate (1x1 convs, BN folded); ring garbage is killed by skip==0 there ---
    g1 = jnp.dot(wg_ref[...], g_bf, preferred_element_type=f32) + bg_ref[...]
    x1 = jnp.dot(wx_ref[...], s_bf, preferred_element_type=f32) + bx_ref[...]
    a = jnp.maximum(g1 + x1, 0.0)                                            # (Fint, Rp) f32
    psi = jnp.sum(a * wp_ref[...], axis=0, keepdims=True) + bp_ref[...]      # VPU MAC + reduce
    psi = jax.nn.sigmoid(psi)                                                # (1, Rp) f32, EUP
    satt = (s_bf.astype(f32) * psi).astype(bf16)                             # gated skip

    # concat([skip_att, g]) along channels == torch.cat order
    cat_bf = jnp.concatenate([satt, g_bf], axis=0)                           # (2C, Rp) bf16

    # interior-column mask over the flat D-range (kills the 2 "wrap" centres per row)
    col = (jax.lax.broadcasted_iota(jnp.int32, (1, d), 1) + 1) % swp
    maskf = jnp.logical_and(col >= 1, col <= sw).astype(f32)                 # (1, D)

    deltas = [(kh - 1) * swp + (kw - 1) for kh in range(3) for kw in range(3)]

    # --- conv1 (3x3, pad=1) as ONE stacked matmul: (C, 9*2C) @ (9*2C, D) ---
    slab1 = jnp.concatenate([cat_bf[:, ctr + dk:ctr + dk + d] for dk in deltas], axis=0)
    h1 = jnp.maximum(jnp.dot(w1_ref[...], slab1, preferred_element_type=f32) + b1_ref[...], 0.0)
    h1 = (h1 * maskf).astype(bf16)                                           # (C, D)

    # zero-padded h1 image rebuilt as a value (no scratch -> nothing to re-zero, megacore-safe)
    zpad = jnp.zeros((C, ctr), bf16)
    h1p = jnp.concatenate([zpad, h1, zpad], axis=-1)                         # (C, Rp) bf16

    # --- conv2 (3x3) as ONE stacked matmul + 1x1 residual conv on the concat ---
    slab2 = jnp.concatenate([h1p[:, ctr + dk:ctr + dk + d] for dk in deltas], axis=0)
    acc2 = jnp.dot(w2_ref[...], slab2, preferred_element_type=f32) + b2_ref[...]
    res = jnp.dot(wr_ref[...], cat_bf[:, ctr:ctr + d], preferred_element_type=f32) + br_ref[...]
    out = jnp.maximum(acc2 + res, 0.0)                                       # (C, D) f32

    # repack valid pixels into a dense (C, SH*SW) slab -> single lane-dense store
    rows = [out[:, r * swp:r * swp + sw] for r in range(sh)]
    o_ref[0] = jnp.concatenate(rows, axis=-1).astype(o_ref.dtype)


def pallas_att_res(g_pad, s_pad, params, sh, sw):
    N, C, Rp = g_pad.shape
    swp = sw + 2
    Fi = params["att_wg"].shape[0]
    d = Rp - 2 * (swp + 1)

    def const(shp):
        return pl.BlockSpec(shp, lambda n, shp=shp: (0,) * len(shp))

    kern = functools.partial(_att_res_kernel, swp=swp, sh=sh, sw=sw)
    cost = pl.CostEstimate(
        flops=int(2 * N * (2 * Fi * C * Rp + (18 * C + 9 * C + 2 * C) * C * d)),
        transcendentals=int(N * Rp),
        bytes_accessed=int(N * (2 * 2 * C * Rp + 4 * C * sh * sw)))

    return pl.pallas_call(
        kern,
        out_shape=jax.ShapeDtypeStruct((N, C, sh * sw), jnp.float32),
        grid=(N,),
        in_specs=[pl.BlockSpec((1, C, Rp), lambda n: (n, 0, 0)),
                  pl.BlockSpec((1, C, Rp), lambda n: (n, 0, 0)),
                  const((Fi, C)), const((Fi, 1)),
                  const((Fi, C)), const((Fi, 1)),
                  const((Fi, 1)), const((1, 1)),
                  const((C, 18 * C)), const((C, 1)),
                  const((C, 9 * C)), const((C, 1)),
                  const((C, 2 * C)), const((C, 1))],
        out_specs=pl.BlockSpec((1, C, sh * sw), lambda n: (n, 0, 0)),
        compiler_params=pltpu.CompilerParams(
            dimension_semantics=("parallel",),
            vmem_limit_bytes=_VMEM_LIMIT),
        cost_estimate=cost,
    )(g_pad, s_pad,
      params["att_wg"], params["att_bg"].reshape(Fi, 1),
      params["att_wx"], params["att_bx"].reshape(Fi, 1),
      params["att_wp"].reshape(Fi, 1), params["att_bp"].reshape(1, 1),
      params["rb_w1_stk"], params["rb_b1"].reshape(C, 1),
      params["rb_w2_stk"], params["rb_b2"].reshape(C, 1),
      params["rb_wr"], params["rb_br"].reshape(C, 1))


# ---------------------------------------------------------------------------
# Parameters (BN folded, eval-mode defaults) — weights for matmuls stored in bf16
# ---------------------------------------------------------------------------
def init_up_block_params(key, in_channels, out_channels):
    Cin, Cout = in_channels, out_channels
    Fint = max(Cout // 2, 1)
    ks = iter(jax.random.split(key, 16))
    rnd = lambda shape: 0.1 * jax.random.normal(next(ks), shape, jnp.float32)
    bf16 = jnp.bfloat16

    def bn_scale(n):
        return 1.0 / jnp.sqrt(jnp.ones((n,), jnp.float32) + _BN_EPS)

    p = {}
    # ConvTranspose2d(Cin, Cout, 2, 2): torch weight (Cin, Cout, 2, 2) -> (4*Cout, Cin), rows (co,kh,kw)
    up_w = rnd((Cin, Cout, 2, 2))
    p["up_w_mat"] = jnp.transpose(up_w, (1, 2, 3, 0)).reshape(4 * Cout, Cin).astype(bf16)
    p["up_b"] = rnd((Cout,))
    p["up_b4"] = jnp.repeat(p["up_b"], 4)

    # AttentionBlock 1x1 convs + folded BN
    def fold1x1(w4d, b):
        w2d = w4d[:, :, 0, 0]
        s = bn_scale(w2d.shape[0])
        return w2d * s[:, None], b * s

    wg, bg = fold1x1(rnd((Fint, Cout, 1, 1)), rnd((Fint,)))
    wx, bx = fold1x1(rnd((Fint, Cout, 1, 1)), rnd((Fint,)))
    wp, bp = fold1x1(rnd((1, Fint, 1, 1)), rnd((1,)))
    p["att_wg"], p["att_bg"] = wg.astype(bf16), bg
    p["att_wx"], p["att_bx"] = wx.astype(bf16), bx
    p["att_wp"], p["att_bp"] = wp[0], bp          # (Fint,), (1,) kept f32 (used on the VPU)

    # ResidualBlock(in=2*Cout, out=Cout), BN folded into conv1/conv2
    def fold3x3(w, b):
        s = bn_scale(w.shape[0])
        return w * s[:, None, None, None], b * s

    w1, b1 = fold3x3(rnd((Cout, 2 * Cout, 3, 3)), rnd((Cout,)))
    p["rb_w1_oihw"] = w1.astype(bf16)
    p["rb_w1_stk"] = jnp.transpose(w1, (0, 2, 3, 1)).reshape(Cout, 18 * Cout).astype(bf16)
    p["rb_b1"] = b1

    w2, b2 = fold3x3(rnd((Cout, Cout, 3, 3)), rnd((Cout,)))
    p["rb_w2_oihw"] = w2.astype(bf16)
    p["rb_w2_stk"] = jnp.transpose(w2, (0, 2, 3, 1)).reshape(Cout, 9 * Cout).astype(bf16)
    p["rb_b2"] = b2

    wr = rnd((Cout, 2 * Cout, 1, 1))[:, :, 0, 0]   # residual 1x1 conv, no BN
    p["rb_wr"] = wr.astype(bf16)
    p["rb_br"] = rnd((Cout,))
    return p


# ---------------------------------------------------------------------------
# UpBlock forward (PyTorch-style NCHW in / NCHW out)
# ---------------------------------------------------------------------------
def up_block_forward(params, x_nchw, skip_nchw):
    """x: (N, Cin, H, W), skip: (N, Cout, SH, SW)  ->  (N, Cout, SH, SW)."""
    Cout = params["rb_br"].shape[0]
    N, Cin, H, W = x_nchw.shape
    SH, SW = skip_nchw.shape[2], skip_nchw.shape[3]

    # 1) ConvTranspose2d(k=2, s=2): Pallas matmul over the 4 sub-kernels (channels-first, bf16 out)
    y4 = pallas_up_matmul(x_nchw.reshape(N, Cin, H * W), params["up_w_mat"], params["up_b4"])
    y = _pixel_shuffle2(y4, Cout, H, W)                       # (N, Cout, 2H, 2W) bf16

    # 2) F.pad size-mismatch branch folded into the +1 zero pad ring the fused kernel needs.
    dY, dX = SH - 2 * H, SW - 2 * W
    g_pad = jnp.pad(y, ((0, 0), (0, 0),
                        (1 + dY // 2, 1 + dY - dY // 2),
                        (1 + dX // 2, 1 + dX - dX // 2)))
    s_pad = jnp.pad(skip_nchw.astype(jnp.bfloat16), ((0, 0), (0, 0), (1, 1), (1, 1)))
    Rp = (SH + 2) * (SW + 2)
    g_pad = g_pad.reshape(N, Cout, Rp)
    s_pad = s_pad.reshape(N, Cout, Rp)

    # 3+4) attention gate + ResidualBlock fused in one Pallas kernel; output already dense.
    out = pallas_att_res(g_pad, s_pad, params, SH, SW)        # (N, Cout, SH*SW) f32
    return out.reshape(N, Cout, SH, SW)


# ---------------------------------------------------------------------------
# Pure-JAX f32 reference (same folded weights) for a numerical sanity check
# ---------------------------------------------------------------------------
def up_block_reference(params, x, skip):
    f32 = jnp.float32
    N, Cin, H, W = x.shape
    Cout = params["rb_br"].shape[0]
    SH, SW = skip.shape[2], skip.shape[3]

    y4 = jnp.einsum("qc,ncp->nqp", params["up_w_mat"].astype(f32), x.reshape(N, Cin, H * W))
    y = _pixel_shuffle2(y4, Cout, H, W) + params["up_b"][None, :, None, None]
    dY, dX = SH - 2 * H, SW - 2 * W
    if (dY, dX) != (0, 0):
        y = jnp.pad(y, ((0, 0), (0, 0), (dY // 2, dY - dY // 2), (dX // 2, dX - dX // 2)))

    g1 = jnp.einsum("fc,nchw->nfhw", params["att_wg"].astype(f32), y) + params["att_bg"][None, :, None, None]
    x1 = jnp.einsum("fc,nchw->nfhw", params["att_wx"].astype(f32), skip) + params["att_bx"][None, :, None, None]
    a = jnp.maximum(g1 + x1, 0.0)
    psi = jax.nn.sigmoid(jnp.einsum("f,nfhw->nhw", params["att_wp"], a)[:, None, :, :] + params["att_bp"][0])
    satt = skip * psi
    cat = jnp.concatenate([satt, y], axis=1)

    dn = ("NCHW", "OIHW", "NCHW")
    h1 = jax.lax.conv_general_dilated(cat, params["rb_w1_oihw"].astype(f32), (1, 1), "SAME",
                                      dimension_numbers=dn) + params["rb_b1"][None, :, None, None]
    h1 = jnp.maximum(h1, 0.0)
    h2 = jax.lax.conv_general_dilated(h1, params["rb_w2_oihw"].astype(f32), (1, 1), "SAME",
                                      dimension_numbers=dn) + params["rb_b2"][None, :, None, None]
    res = jnp.einsum("oc,nchw->nohw", params["rb_wr"].astype(f32), cat) + params["rb_br"][None, :, None, None]
    return jnp.maximum(h2 + res, 0.0)


# ---------------------------------------------------------------------------
if __name__ == "__main__":
    key = jax.random.PRNGKey(0)
    k_param, k_x, k_skip = jax.random.split(key, 3)

    in_channels, out_channels = 8, 4
    N, H, W = 2, 8, 8                      # decoder feature map (pre-upsample)

    params = init_up_block_params(k_param, in_channels, out_channels)
    x = jax.random.normal(k_x, (N, in_channels, H, W), jnp.float32)                 # NCHW
    skip = jax.random.normal(k_skip, (N, out_channels, 2 * H, 2 * W), jnp.float32)  # NCHW

    fwd = jax.jit(up_block_forward)
    out = jax.block_until_ready(fwd(params, x, skip))
    assert out.shape == (N, out_channels, 2 * H, 2 * W), out.shape
    assert bool(jnp.all(jnp.isfinite(out)))

    # numerical check against a pure-JAX f32 reference (loose tolerance for bf16 matmul operands)
    ref = jax.jit(up_block_reference)(params, x, skip)
    err = float(jnp.max(jnp.abs(out - ref)))
    mag = float(jnp.max(jnp.abs(ref)))
    assert err <= 5e-2 + 5e-2 * mag, (err, mag)

    print("KERNEL_OK")
</pallas_src>

<mosaic_0001>
module attributes {stable_mosaic.version = 11 : i64} {
  func.func @_up_matmul_kernel(%arg0: i32, %arg1: i32, %arg2: memref<1x8x64xf32, #tpu.memory_space<vmem>>, %arg3: memref<16x8xbf16, #tpu.memory_space<vmem>>, %arg4: memref<16x1xf32, #tpu.memory_space<vmem>>, %arg5: memref<1x16x64xbf16, #tpu.memory_space<vmem>>) attributes {dimension_semantics = [#tpu.dimension_semantics<parallel>, #tpu.dimension_semantics<parallel>], iteration_bounds = array<i64: 2, 1>, scalar_prefetch = 0 : i64, scratch_operands = 0 : i64, tpu.core_type = #tpu.core_type<tc>, window_params = [{transform_indices = @transform_0, window_bounds = array<i64: 1, 8, 64>}, {pipeline_mode = #tpu.pipeline_mode<synchronous>, transform_indices = @transform_1, window_bounds = array<i64: 16, 8>}, {pipeline_mode = #tpu.pipeline_mode<synchronous>, transform_indices = @transform_2, window_bounds = array<i64: 16, 1>}, {transform_indices = @transform_3, window_bounds = array<i64: 1, 16, 64>}]} {
    %c0 = arith.constant 0 : index
    %c0_0 = arith.constant 0 : index
    %c0_1 = arith.constant 0 : index
    %0 = vector.load %arg2[%c0, %c0_0, %c0_1] : memref<1x8x64xf32, #tpu.memory_space<vmem>>, vector<1x8x64xf32>
    %1 = vector.shape_cast %0 : vector<1x8x64xf32> to vector<8x64xf32>
    %2 = arith.truncf %1 : vector<8x64xf32> to vector<8x64xbf16>
    %c0_2 = arith.constant 0 : index
    %c0_3 = arith.constant 0 : index
    %3 = vector.load %arg3[%c0_2, %c0_3] : memref<16x8xbf16, #tpu.memory_space<vmem>>, vector<16x8xbf16>
    %cst = arith.constant dense<0.000000e+00> : vector<16x64xf32>
    %4 = tpu.matmul %3, %2, %cst {dimension_numbers = #tpu.dot_dimension_numbers<[1], [0], [0], [1], [0, 0, 1, 1], [], []>} : vector<16x8xbf16>, vector<8x64xbf16>, vector<16x64xf32> -> vector<16x64xf32>
    %c0_4 = arith.constant 0 : index
    %c0_5 = arith.constant 0 : index
    %5 = vector.load %arg4[%c0_4, %c0_5] : memref<16x1xf32, #tpu.memory_space<vmem>>, vector<16x1xf32>
    %6 = vector.broadcast %5 : vector<16x1xf32> to vector<16x64xf32>
    %7 = arith.addf %4, %6 : vector<16x64xf32>
    %8 = arith.truncf %7 : vector<16x64xf32> to vector<16x64xbf16>
    %c0_6 = arith.constant 0 : index
    %c0_7 = arith.constant 0 : index
    %c0_8 = arith.constant 0 : index
    %9 = vector.load %arg5[%c0_6, %c0_7, %c0_8] : memref<1x16x64xbf16, #tpu.memory_space<vmem>>, vector<1x16x64xbf16>
    %10 = vector.shape_cast %9 : vector<1x16x64xbf16> to vector<16x64xbf16>
    %11 = vector.shape_cast %8 : vector<16x64xbf16> to vector<1x16x64xbf16>
    tpu.vector_store %arg5[%c0_6, %c0_7, %c0_8], %11 {strides = array<i32>} : memref<1x16x64xbf16, #tpu.memory_space<vmem>>, vector<1x16x64xbf16>,
    return
  }
  func.func @transform_0(%arg0: i32, %arg1: i32) -> (i32, i32, i32) {
    %c0_i32 = arith.constant 0 : i32
    %c0_i32_0 = arith.constant 0 : i32
    return %arg0, %c0_i32, %arg1 : i32, i32, i32
  }
  func.func @transform_1(%arg0: i32, %arg1: i32) -> (i32, i32) {
    %c0_i32 = arith.constant 0 : i32
    %c0_i32_0 = arith.constant 0 : i32
    %c0_i32_1 = arith.constant 0 : i32
    return %c0_i32, %c0_i32_0 : i32, i32
  }
  func.func @transform_2(%arg0: i32, %arg1: i32) -> (i32, i32) {
    %c0_i32 = arith.constant 0 : i32
    %c0_i32_0 = arith.constant 0 : i32
    %c0_i32_1 = arith.constant 0 : i32
    return %c0_i32, %c0_i32_0 : i32, i32
  }
  func.func @transform_3(%arg0: i32, %arg1: i32) -> (i32, i32, i32) {
    %c0_i32 = arith.constant 0 : i32
    %c0_i32_0 = arith.constant 0 : i32
    return %arg0, %c0_i32, %arg1 : i32, i32, i32
  }
}

module attributes {stable_mosaic.version = 11 : i64} {
  func.func @_att_res_kernel(%arg0: i32, %arg1: memref<1x4x324xbf16, #tpu.memory_space<vmem>>, %arg2: memref<1x4x324xbf16, #tpu.memory_space<vmem>>, %arg3: memref<2x4xbf16, #tpu.memory_space<vmem>>, %arg4: memref<2x1xf32, #tpu.memory_space<vmem>>, %arg5: memref<2x4xbf16, #tpu.memory_space<vmem>>, %arg6: memref<2x1xf32, #tpu.memory_space<vmem>>, %arg7: memref<2x1xf32, #tpu.memory_space<vmem>>, %arg8: memref<1x1xf32, #tpu.memory_space<vmem>>, %arg9: memref<4x72xbf16, #tpu.memory_space<vmem>>, %arg10: memref<4x1xf32, #tpu.memory_space<vmem>>, %arg11: memref<4x36xbf16, #tpu.memory_space<vmem>>, %arg12: memref<4x1xf32, #tpu.memory_space<vmem>>, %arg13: memref<4x8xbf16, #tpu.memory_space<vmem>>, %arg14: memref<4x1xf32, #tpu.memory_space<vmem>>, %arg15: memref<1x4x256xf32, #tpu.memory_space<vmem>>) attributes {dimension_semantics = [#tpu.dimension_semantics<parallel>], iteration_bounds = array<i64: 2>, scalar_prefetch = 0 : i64, scratch_operands = 0 : i64, tpu.core_type = #tpu.core_type<tc>, window_params = [{transform_indices = @transform_0, window_bounds = array<i64: 1, 4, 324>}, {transform_indices = @transform_1, window_bounds = array<i64: 1, 4, 324>}, {pipeline_mode = #tpu.pipeline_mode<synchronous>, transform_indices = @transform_2, window_bounds = array<i64: 2, 4>}, {pipeline_mode = #tpu.pipeline_mode<synchronous>, transform_indices = @transform_3, window_bounds = array<i64: 2, 1>}, {pipeline_mode = #tpu.pipeline_mode<synchronous>, transform_indices = @transform_4, window_bounds = array<i64: 2, 4>}, {pipeline_mode = #tpu.pipeline_mode<synchronous>, transform_indices = @transform_5, window_bounds = array<i64: 2, 1>}, {pipeline_mode = #tpu.pipeline_mode<synchronous>, transform_indices = @transform_6, window_bounds = array<i64: 2, 1>}, {pipeline_mode = #tpu.pipeline_mode<synchronous>, transform_indices = @transform_7, window_bounds = array<i64: 1, 1>}, {pipeline_mode = #tpu.pipeline_mode<synchronous>, transform_indices = @transform_8, window_bounds = array<i64: 4, 72>}, {pipeline_mode = #tpu.pipeline_mode<synchronous>, transform_indices = @transform_9, window_bounds = array<i64: 4, 1>}, {pipeline_mode = #tpu.pipeline_mode<synchronous>, transform_indices = @transform_10, window_bounds = array<i64: 4, 36>}, {pipeline_mode = #tpu.pipeline_mode<synchronous>, transform_indices = @transform_11, window_bounds = array<i64: 4, 1>}, {pipeline_mode = #tpu.pipeline_mode<synchronous>, transform_indices = @transform_12, window_bounds = array<i64: 4, 8>}, {pipeline_mode = #tpu.pipeline_mode<synchronous>, transform_indices = @transform_13, window_bounds = array<i64: 4, 1>}, {transform_indices = @transform_14, window_bounds = array<i64: 1, 4, 256>}]} {
    %c0 = arith.constant 0 : index
    %c0_0 = arith.constant 0 : index
    %c0_1 = arith.constant 0 : index
    %0 = vector.load %arg1[%c0, %c0_0, %c0_1] : memref<1x4x324xbf16, #tpu.memory_space<vmem>>, vector<1x4x324xbf16>
    %1 = vector.shape_cast %0 : vector<1x4x324xbf16> to vector<4x324xbf16>
    %c0_2 = arith.constant 0 : index
    %c0_3 = arith.constant 0 : index
    %c0_4 = arith.constant 0 : index
    %2 = vector.load %arg2[%c0_2, %c0_3, %c0_4] : memref<1x4x324xbf16, #tpu.memory_space<vmem>>, vector<1x4x324xbf16>
    %3 = vector.shape_cast %2 : vector<1x4x324xbf16> to vector<4x324xbf16>
    %c0_5 = arith.constant 0 : index
    %c0_6 = arith.constant 0 : index
    %4 = vector.load %arg3[%c0_5, %c0_6] : memref<2x4xbf16, #tpu.memory_space<vmem>>, vector<2x4xbf16>
    %cst = arith.constant dense<0.000000e+00> : vector<2x324xf32>
    %5 = tpu.matmul %4, %1, %cst {dimension_numbers = #tpu.dot_dimension_numbers<[1], [0], [0], [1], [0, 0, 1, 1], [], []>} : vector<2x4xbf16>, vector<4x324xbf16>, vector<2x324xf32> -> vector<2x324xf32>
    %c0_7 = arith.constant 0 : index
    %c0_8 = arith.constant 0 : index
    %6 = vector.load %arg4[%c0_7, %c0_8] : memref<2x1xf32, #tpu.memory_space<vmem>>, vector<2x1xf32>
    %7 = vector.broadcast %6 : vector<2x1xf32> to vector<2x324xf32>
    %8 = arith.addf %5, %7 : vector<2x324xf32>
    %c0_9 = arith.constant 0 : index
    %c0_10 = arith.constant 0 : index
    %9 = vector.load %arg5[%c0_9, %c0_10] : memref<2x4xbf16, #tpu.memory_space<vmem>>, vector<2x4xbf16>
    %cst_11 = arith.constant dense<0.000000e+00> : vector<2x324xf32>
    %10 = tpu.matmul %9, %3, %cst_11 {dimension_numbers = #tpu.dot_dimension_numbers<[1], [0], [0], [1], [0, 0, 1, 1], [], []>} : vector<2x4xbf16>, vector<4x324xbf16>, vector<2x324xf32> -> vector<2x324xf32>
    %c0_12 = arith.constant 0 : index
    %c0_13 = arith.constant 0 : index
    %11 = vector.load %arg6[%c0_12, %c0_13] : memref<2x1xf32, #tpu.memory_space<vmem>>, vector<2x1xf32>
    %12 = vector.broadcast %11 : vector<2x1xf32> to vector<2x324xf32>
    %13 = arith.addf %10, %12 : vector<2x324xf32>
    %14 = arith.addf %8, %13 : vector<2x324xf32>
    %cst_14 = arith.constant 0.000000e+00 : f32
    %15 = vector.broadcast %cst_14 : f32 to vector<2x324xf32>
    %16 = arith.maximumf %14, %15 : vector<2x324xf32>
    %c0_15 = arith.constant 0 : index
    %c0_16 = arith.constant 0 : index
    %17 = vector.load %arg7[%c0_15, %c0_16] : memref<2x1xf32, #tpu.memory_space<vmem>>, vector<2x1xf32>
    %18 = vector.broadcast %17 : vector<2x1xf32> to vector<2x324xf32>
    %19 = arith.mulf %16, %18 : vector<2x324xf32>
    %cst_17 = arith.constant dense<0.000000e+00> : vector<324xf32>
    %20 = vector.multi_reduction <add>, %19, %cst_17 [0] : vector<2x324xf32> to vector<324xf32>
    %21 = vector.shape_cast %20 : vector<324xf32> to vector<1x324xf32>
    %c0_18 = arith.constant 0 : index
    %c0_19 = arith.constant 0 : index
    %22 = vector.load %arg8[%c0_18, %c0_19] : memref<1x1xf32, #tpu.memory_space<vmem>>, vector<1x1xf32>
    %23 = vector.broadcast %22 : vector<1x1xf32> to vector<1x324xf32>
    %24 = arith.addf %21, %23 : vector<1x324xf32>
    %25 = arith.negf %24 : vector<1x324xf32>
    %26 = math.exp %25 : vector<1x324xf32>
    %cst_20 = arith.constant 1.000000e+00 : f32
    %27 = vector.broadcast %cst_20 : f32 to vector<1x324xf32>
    %28 = arith.addf %27, %26 : vector<1x324xf32>
    %29 = arith.divf %27, %28 : vector<1x324xf32>
    %30 = arith.extf %3 : vector<4x324xbf16> to vector<4x324xf32>
    %31 = vector.broadcast %29 : vector<1x324xf32> to vector<4x324xf32>
    %32 = arith.mulf %30, %31 : vector<4x324xf32>
    %33 = arith.truncf %32 : vector<4x324xf32> to vector<4x324xbf16>
    %34 = tpu.concatenate %33, %1 in 0 : vector<4x324xbf16>, vector<4x324xbf16> -> vector<8x324xbf16>
    %35 = tpu.iota {dimensions = array<i32: 1>} : vector<1x286xi32>
    %c1_i32 = arith.constant 1 : i32
    %36 = vector.broadcast %c1_i32 : i32 to vector<1x286xi32>
    %37 = arith.addi %35, %36 : vector<1x286xi32>
    %c18_i32 = arith.constant 18 : i32
    %c0_i32 = arith.constant 0 : i32
    %38 = arith.cmpi eq, %c18_i32, %c0_i32 : i32
    %c1_i32_21 = arith.constant 1 : i32
    %39 = arith.select %38, %c1_i32_21, %c18_i32 : i32
    %40 = vector.broadcast %39 : i32 to vector<1x286xi32>
    %41 = arith.remsi %37, %40 : vector<1x286xi32>
    %c0_i32_22 = arith.constant 0 : i32
    %42 = vector.broadcast %c0_i32_22 : i32 to vector<1x286xi32>
    %43 = arith.cmpi ne, %41, %42 : vector<1x286xi32>
    %c0_i32_23 = arith.constant 0 : i32
    %44 = vector.broadcast %c0_i32_23 : i32 to vector<1x286xi32>
    %45 = arith.cmpi slt, %41, %44 : vector<1x286xi32>
    %c0_i32_24 = arith.constant 0 : i32
    %46 = arith.cmpi slt, %39, %c0_i32_24 : i32
    %47 = vector.broadcast %46 : i1 to vector<1x286xi1>
    %48 = vector.broadcast %47 : vector<1x286xi1> to vector<1x286xi1>
    %49 = arith.xori %45, %48 : vector<1x286xi1>
    %50 = arith.andi %49, %43 : vector<1x286xi1>
    %51 = vector.broadcast %39 : i32 to vector<1x286xi32>
    %52 = arith.addi %41, %51 : vector<1x286xi32>
    %53 = arith.select %50, %52, %41 : vector<1x286xi1>, vector<1x286xi32>
    %c1_i32_25 = arith.constant 1 : i32
    %54 = vector.broadcast %c1_i32_25 : i32 to vector<1x286xi32>
    %55 = arith.cmpi sge, %53, %54 : vector<1x286xi32>
    %c16_i32 = arith.constant 16 : i32
    %56 = vector.broadcast %c16_i32 : i32 to vector<1x286xi32>
    %57 = arith.cmpi sle, %53, %56 : vector<1x286xi32>
    %58 = arith.andi %55, %57 : vector<1x286xi1>
    %59 = arith.extui %58 : vector<1x286xi1> to vector<1x286xi32>
    %60 = arith.sitofp %59 : vector<1x286xi32> to vector<1x286xf32>
    %61 = vector.extract_strided_slice %34 {offsets = [0, 0], sizes = [8, 286], strides = [1, 1]} : vector<8x324xbf16> to vector<8x286xbf16>
    %62 = vector.extract_strided_slice %34 {offsets = [0, 1], sizes = [8, 286], strides = [1, 1]} : vector<8x324xbf16> to vector<8x286xbf16>
    %63 = vector.extract_strided_slice %34 {offsets = [0, 2], sizes = [8, 286], strides = [1, 1]} : vector<8x324xbf16> to vector<8x286xbf16>
    %64 = vector.extract_strided_slice %34 {offsets = [0, 18], sizes = [8, 286], strides = [1, 1]} : vector<8x324xbf16> to vector<8x286xbf16>
    %65 = vector.extract_strided_slice %34 {offsets = [0, 19], sizes = [8, 286], strides = [1, 1]} : vector<8x324xbf16> to vector<8x286xbf16>
    %66 = vector.extract_strided_slice %34 {offsets = [0, 20], sizes = [8, 286], strides = [1, 1]} : vector<8x324xbf16> to vector<8x286xbf16>
    %67 = vector.extract_strided_slice %34 {offsets = [0, 36], sizes = [8, 286], strides = [1, 1]} : vector<8x324xbf16> to vector<8x286xbf16>
    %68 = vector.extract_strided_slice %34 {offsets = [0, 37], sizes = [8, 286], strides = [1, 1]} : vector<8x324xbf16> to vector<8x286xbf16>
    %69 = vector.extract_strided_slice %34 {offsets = [0, 38], sizes = [8, 286], strides = [1, 1]} : vector<8x324xbf16> to vector<8x286xbf16>
    %70 = tpu.concatenate %61, %62, %63, %64, %65, %66, %67, %68, %69 in 0 : vector<8x286xbf16>, vector<8x286xbf16>, vector<8x286xbf16>, vector<8x286xbf16>, vector<8x286xbf16>, vector<8x286xbf16>, vector<8x286xbf16>, vector<8x286xbf16>, vector<8x286xbf16> -> vector<72x286xbf16>
    %c0_26 = arith.constant 0 : index
    %c0_27 = arith.constant 0 : index
    %71 = vector.load %arg9[%c0_26, %c0_27] : memref<4x72xbf16, #tpu.memory_space<vmem>>, vector<4x72xbf16>
    %cst_28 = arith.constant dense<0.000000e+00> : vector<4x286xf32>
    %72 = tpu.matmul %71, %70, %cst_28 {dimension_numbers = #tpu.dot_dimension_numbers<[1], [0], [0], [1], [0, 0, 1, 1], [], []>} : vector<4x72xbf16>, vector<72x286xbf16>, vector<4x286xf32> -> vector<4x286xf32>
    %c0_29 = arith.constant 0 : index
    %c0_30 = arith.constant 0 : index
    %73 = vector.load %arg10[%c0_29, %c0_30] : memref<4x1xf32, #tpu.memory_space<vmem>>, vector<4x1xf32>
    %74 = vector.broadcast %73 : vector<4x1xf32> to vector<4x286xf32>
    %75 = arith.addf %72, %74 : vector<4x286xf32>
    %cst_31 = arith.constant 0.000000e+00 : f32
    %76 = vector.broadcast %cst_31 : f32 to vector<4x286xf32>
    %77 = arith.maximumf %75, %76 : vector<4x286xf32>
    %78 = vector.broadcast %60 : vector<1x286xf32> to vector<4x286xf32>
    %79 = arith.mulf %77, %78 : vector<4x286xf32>
    %80 = arith.truncf %79 : vector<4x286xf32> to vector<4x286xbf16>
    %cst_32 = arith.constant 0.000000e+00 : bf16
    %81 = vector.broadcast %cst_32 : bf16 to vector<4x19xbf16>
    %82 = tpu.concatenate %81, %80, %81 in 1 : vector<4x19xbf16>, vector<4x286xbf16>, vector<4x19xbf16> -> vector<4x324xbf16>
    %83 = vector.extract_strided_slice %82 {offsets = [0, 0], sizes = [4, 286], strides = [1, 1]} : vector<4x324xbf16> to vector<4x286xbf16>
    %84 = vector.extract_strided_slice %82 {offsets = [0, 1], sizes = [4, 286], strides = [1, 1]} : vector<4x324xbf16> to vector<4x286xbf16>
    %85 = vector.extract_strided_slice %82 {offsets = [0, 2], sizes = [4, 286], strides = [1, 1]} : vector<4x324xbf16> to vector<4x286xbf16>
    %86 = vector.extract_strided_slice %82 {offsets = [0, 18], sizes = [4, 286], strides = [1, 1]} : vector<4x324xbf16> to vector<4x286xbf16>
    %87 = vector.extract_strided_slice %82 {offsets = [0, 19], sizes = [4, 286], strides = [1, 1]} : vector<4x324xbf16> to vector<4x286xbf16>
    %88 = vector.extract_strided_slice %82 {offsets = [0, 20], sizes = [4, 286], strides = [1, 1]} : vector<4x324xbf16> to vector<4x286xbf16>
    %89 = vector.extract_strided_slice %82 {offsets = [0, 36], sizes = [4, 286], strides = [1, 1]} : vector<4x324xbf16> to vector<4x286xbf16>
    %90 = vector.extract_strided_slice %82 {offsets = [0, 37], sizes = [4, 286], strides = [1, 1]} : vector<4x324xbf16> to vector<4x286xbf16>
    %91 = vector.extract_strided_slice %82 {offsets = [0, 38], sizes = [4, 286], strides = [1, 1]} : vector<4x324xbf16> to vector<4x286xbf16>
    %92 = tpu.concatenate %83, %84, %85, %86, %87, %88, %89, %90, %91 in 0 : vector<4x286xbf16>, vector<4x286xbf16>, vector<4x286xbf16>, vector<4x286xbf16>, vector<4x286xbf16>, vector<4x286xbf16>, vector<4x286xbf16>, vector<4x286xbf16>, vector<4x286xbf16> -> vector<36x286xbf16>
    %c0_33 = arith.constant 0 : index
    %c0_34 = arith.constant 0 : index
    %93 = vector.load %arg11[%c0_33, %c0_34] : memref<4x36xbf16, #tpu.memory_space<vmem>>, vector<4x36xbf16>
    %cst_35 = arith.constant dense<0.000000e+00> : vector<4x286xf32>
    %94 = tpu.matmul %93, %92, %cst_35 {dimension_numbers = #tpu.dot_dimension_numbers<[1], [0], [0], [1], [0, 0, 1, 1], [], []>} : vector<4x36xbf16>, vector<36x286xbf16>, vector<4x286xf32> -> vector<4x286xf32>
    %c0_36 = arith.constant 0 : index
    %c0_37 = arith.constant 0 : index
    %95 = vector.load %arg12[%c0_36, %c0_37] : memref<4x1xf32, #tpu.memory_space<vmem>>, vector<4x1xf32>
    %96 = vector.broadcast %95 : vector<4x1xf32> to vector<4x286xf32>
    %97 = arith.addf %94, %96 : vector<4x286xf32>
    %c0_38 = arith.constant 0 : index
    %c0_39 = arith.constant 0 : index
    %98 = vector.load %arg13[%c0_38, %c0_39] : memref<4x8xbf16, #tpu.memory_space<vmem>>, vector<4x8xbf16>
    %99 = vector.extract_strided_slice %34 {offsets = [0, 19], sizes = [8, 286], strides = [1, 1]} : vector<8x324xbf16> to vector<8x286xbf16>
    %cst_40 = arith.constant dense<0.000000e+00> : vector<4x286xf32>
    %100 = tpu.matmul %98, %99, %cst_40 {dimension_numbers = #tpu.dot_dimension_numbers<[1], [0], [0], [1], [0, 0, 1, 1], [], []>} : vector<4x8xbf16>, vector<8x286xbf16>, vector<4x286xf32> -> vector<4x286xf32>
    %c0_41 = arith.constant 0 : index
    %c0_42 = arith.constant 0 : index
    %101 = vector.load %arg14[%c0_41, %c0_42] : memref<4x1xf32, #tpu.memory_space<vmem>>, vector<4x1xf32>
    %102 = vector.broadcast %101 : vector<4x1xf32> to vector<4x286xf32>
    %103 = arith.addf %100, %102 : vector<4x286xf32>
    %104 = arith.addf %97, %103 : vector<4x286xf32>
    %cst_43 = arith.constant 0.000000e+00 : f32
    %105 = vector.broadcast %cst_43 : f32 to vector<4x286xf32>
    %106 = arith.maximumf %104, %105 : vector<4x286xf32>
    %107 = vector.extract_strided_slice %106 {offsets = [0, 0], sizes = [4, 16], strides = [1, 1]} : vector<4x286xf32> to vector<4x16xf32>
    %108 = vector.extract_strided_slice %106 {offsets = [0, 18], sizes = [4, 16], strides = [1, 1]} : vector<4x286xf32> to vector<4x16xf32>
    %109 = vector.extract_strided_slice %106 {offsets = [0, 36], sizes = [4, 16], strides = [1, 1]} : vector<4x286xf32> to vector<4x16xf32>
    %110 = vector.extract_strided_slice %106 {offsets = [0, 54], sizes = [4, 16], strides = [1, 1]} : vector<4x286xf32> to vector<4x16xf32>
    %111 = vector.extract_strided_slice %106 {offsets = [0, 72], sizes = [4, 16], strides = [1, 1]} : vector<4x286xf32> to vector<4x16xf32>
    %112 = vector.extract_strided_slice %106 {offsets = [0, 90], sizes = [4, 16], strides = [1, 1]} : vector<4x286xf32> to vector<4x16xf32>
    %113 = vector.extract_strided_slice %106 {offsets = [0, 108], sizes = [4, 16], strides = [1, 1]} : vector<4x286xf32> to vector<4x16xf32>
    %114 = vector.extract_strided_slice %106 {offsets = [0, 126], sizes = [4, 16], strides = [1, 1]} : vector<4x286xf32> to vector<4x16xf32>
    %115 = vector.extract_strided_slice %106 {offsets = [0, 144], sizes = [4, 16], strides = [1, 1]} : vector<4x286xf32> to vector<4x16xf32>
    %116 = vector.extract_strided_slice %106 {offsets = [0, 162], sizes = [4, 16], strides = [1, 1]} : vector<4x286xf32> to vector<4x16xf32>
    %117 = vector.extract_strided_slice %106 {offsets = [0, 180], sizes = [4, 16], strides = [1, 1]} : vector<4x286xf32> to vector<4x16xf32>
    %118 = vector.extract_strided_slice %106 {offsets = [0, 198], sizes = [4, 16], strides = [1, 1]} : vector<4x286xf32> to vector<4x16xf32>
    %119 = vector.extract_strided_slice %106 {offsets = [0, 216], sizes = [4, 16], strides = [1, 1]} : vector<4x286xf32> to vector<4x16xf32>
    %120 = vector.extract_strided_slice %106 {offsets = [0, 234], sizes = [4, 16], strides = [1, 1]} : vector<4x286xf32> to vector<4x16xf32>
    %121 = vector.extract_strided_slice %106 {offsets = [0, 252], sizes = [4, 16], strides = [1, 1]} : vector<4x286xf32> to vector<4x16xf32>
    %122 = vector.extract_strided_slice %106 {offsets = [0, 270], sizes = [4, 16], strides = [1, 1]} : vector<4x286xf32> to vector<4x16xf32>
    %123 = tpu.concatenate %107, %108, %109, %110, %111, %112, %113, %114, %115, %116, %117, %118, %119, %120, %121, %122 in 1 : vector<4x16xf32>, vector<4x16xf32>, vector<4x16xf32>, vector<4x16xf32>, vector<4x16xf32>, vector<4x16xf32>, vector<4x16xf32>, vector<4x16xf32>, vector<4x16xf32>, vector<4x16xf32>, vector<4x16xf32>, vector<4x16xf32>, vector<4x16xf32>, vector<4x16xf32>, vector<4x16xf32>, vector<4x16xf32> -> vector<4x256xf32>
    %c0_44 = arith.constant 0 : index
    %c0_45 = arith.constant 0 : index
    %c0_46 = arith.constant 0 : index
    %124 = vector.load %arg15[%c0_44, %c0_45, %c0_46] : memref<1x4x256xf32, #tpu.memory_space<vmem>>, vector<1x4x256xf32>
    %125 = vector.shape_cast %124 : vector<1x4x256xf32> to vector<4x256xf32>
    %126 = vector.shape_cast %123 : vector<4x256xf32> to vector<1x4x256xf32>
    tpu.vector_store %arg15[%c0_44, %c0_45, %c0_46], %126 {strides = array<i32>} : memref<1x4x256xf32, #tpu.memory_space<vmem>>, vector<1x4x256xf32>,
    return
  }
  func.func @transform_0(%arg0: i32) -> (i32, i32, i32) {
    %c0_i32 = arith.constant 0 : i32
    %c0_i32_0 = arith.constant 0 : i32
    %c0_i32_1 = arith.constant 0 : i32
    return %arg0, %c0_i32, %c0_i32_0 : i32, i32, i32
  }
  func.func @transform_1(%arg0: i32) -> (i32, i32, i32) {
    %c0_i32 = arith.constant 0 : i32
    %c0_i32_0 = arith.constant 0 : i32
    %c0_i32_1 = arith.constant 0 : i32
    return %arg0, %c0_i32, %c0_i32_0 : i32, i32, i32
  }
  func.func @transform_2(%arg0: i32) -> (i32, i32) {
    %c0_i32 = arith.constant 0 : i32
    %c0_i32_0 = arith.constant 0 : i32
    %c0_i32_1 = arith.constant 0 : i32
    return %c0_i32, %c0_i32_0 : i32, i32
  }
  func.func @transform_3(%arg0: i32) -> (i32, i32) {
    %c0_i32 = arith.constant 0 : i32
    %c0_i32_0 = arith.constant 0 : i32
    %c0_i32_1 = arith.constant 0 : i32
    return %c0_i32, %c0_i32_0 : i32, i32
  }
  func.func @transform_4(%arg0: i32) -> (i32, i32) {
    %c0_i32 = arith.constant 0 : i32
    %c0_i32_0 = arith.constant 0 : i32
    %c0_i32_1 = arith.constant 0 : i32
    return %c0_i32, %c0_i32_0 : i32, i32
  }
  func.func @transform_5(%arg0: i32) -> (i32, i32) {
    %c0_i32 = arith.constant 0 : i32
    %c0_i32_0 = arith.constant 0 : i32
    %c0_i32_1 = arith.constant 0 : i32
    return %c0_i32, %c0_i32_0 : i32, i32
  }
  func.func @transform_6(%arg0: i32) -> (i32, i32) {
    %c0_i32 = arith.constant 0 : i32
    %c0_i32_0 = arith.constant 0 : i32
    %c0_i32_1 = arith.constant 0 : i32
    return %c0_i32, %c0_i32_0 : i32, i32
  }
  func.func @transform_7(%arg0: i32) -> (i32, i32) {
    %c0_i32 = arith.constant 0 : i32
    %c0_i32_0 = arith.constant 0 : i32
    %c0_i32_1 = arith.constant 0 : i32
    return %c0_i32, %c0_i32_0 : i32, i32
  }
  func.func @transform_8(%arg0: i32) -> (i32, i32) {
    %c0_i32 = arith.constant 0 : i32
    %c0_i32_0 = arith.constant 0 : i32
    %c0_i32_1 = arith.constant 0 : i32
    return %c0_i32, %c0_i32_0 : i32, i32
  }
  func.func @transform_9(%arg0: i32) -> (i32, i32) {
    %c0_i32 = arith.constant 0 : i32
    %c0_i32_0 = arith.constant 0 : i32
    %c0_i32_1 = arith.constant 0 : i32
    return %c0_i32, %c0_i32_0 : i32, i32
  }
  func.func @transform_10(%arg0: i32) -> (i32, i32) {
    %c0_i32 = arith.constant 0 : i32
    %c0_i32_0 = arith.constant 0 : i32
    %c0_i32_1 = arith.constant 0 : i32
    return %c0_i32, %c0_i32_0 : i32, i32
  }
  func.func @transform_11(%arg0: i32) -> (i32, i32) {
    %c0_i32 = arith.constant 0 : i32
    %c0_i32_0 = arith.constant 0 : i32
    %c0_i32_1 = arith.constant 0 : i32
    return %c0_i32, %c0_i32_0 : i32, i32
  }
  func.func @transform_12(%arg0: i32) -> (i32, i32) {
    %c0_i32 = arith.constant 0 : i32
    %c0_i32_0 = arith.constant 0 : i32
    %c0_i32_1 = arith.constant 0 : i32
    return %c0_i32, %c0_i32_0 : i32, i32
  }
  func.func @transform_13(%arg0: i32) -> (i32, i32) {
    %c0_i32 = arith.constant 0 : i32
    %c0_i32_0 = arith.constant 0 : i32
    %c0_i32_1 = arith.constant 0 : i32
    return %c0_i32, %c0_i32_0 : i32, i32
  }
  func.func @transform_14(%arg0: i32) -> (i32, i32, i32) {
    %c0_i32 = arith.constant 0 : i32
    %c0_i32_0 = arith.constant 0 : i32
    %c0_i32_1 = arith.constant 0 : i32
    return %arg0, %c0_i32, %c0_i32_0 : i32, i32, i32
  }
}

</mosaic_0001>

<llo_original>
// kernel: up_block_forward.2
$region0: #{up_block_forward.2}
  #allocation0 [shape = 'u32[]', space=smem, size = 0x4, offset = 0x4, fixed_abs, tag = 'smem constant byte address 0x4 - core index']
  #allocation1 [shape = 'u32[144,128]{1,0:T(1,128)}', space=vmem, size = 0x12000, scoped, tag = 'internal scratch']
  %s0 = inlined_call_operand.vmem [shape: f32[2,8,64], index: 0, kind: input, shape index: {}]
  %s1 = inlined_call_operand.vmem [shape: bf16[16,8], index: 1, kind: input, shape index: {}]
  %s2 = inlined_call_operand.vmem [shape: f32[16,1], index: 2, kind: input, shape index: {}]
  %s3 = inlined_call_operand.vmem [shape: bf16[2,16,64], index: 3, kind: output, shape index: {}]
  %s4 = sld [smem:[#allocation0]]
  $region45: #{up_block_forward.2} parent=0
    _
  %s6 = ssub.s32 1, %s4
  %s7 = scalar_select 0, %s6, %s4
  loop: start=0, step=1, limit=4
  $region2: #{up_block_forward.2} parent=0 // loop_pre_header
    _
  $region3: #{up_block_forward.2} parent=0 // loop_header
    %s9 = sphi 0, %s13
    %p10 = scmp.ge.s32.totalorder %s9, 4
    %s16 = sphi 0, %s28
    %s17 = sphi 0, %s24
    %s18 = sphi 0, %s16
    %s19 = sphi 0, %s17
    %s20 = sphi 0, %s18
    %s21 = sphi 0, %s19
    %s33 = sphi 0, %s35
    %s36 = sphi 0, %s33
    %s37 = sphi 0, %s36
    %s53 = sphi 0, %s37
    %s57 = sphi 0, %s57
    %s59 = sphi 0, %s57
    %s60 = sphi 0, %s59
    %s74 = sphi 0, %s60
    %s78 = sphi 0, %s78
    %s80 = sphi 0, %s78
    %s81 = sphi 0, %s80
    %s95 = sphi 0, %s81
    %s103 = sphi 0, %s105
    %s106 = sphi 0, %s103
    %s107 = sphi 0, %s106
    %s123 = sphi 0, %s107
  $region4: #{up_block_forward.2} parent=0 // loop_header_branch
    %12 = sbr.rel (%p10) target = $region8
  $region5: #{up_block_forward.2} parent=0 // loop_body
    %s14 = ssub.s32 %s9, 1
    %s15 = ssub.s32 %s9, 2
    %s22 = sadd.s32 1, %s17
    %p23 = scmp.ge.s32.totalorder %s22, 1
    %s24 = scalar_select %p23, 0, %s22
    %s25 = sadd.s32 1, %s16
    %s26 = scalar_select %p23, %s25, %s16
    %p27 = scmp.ge.s32.totalorder %s26, 2
    %s28 = scalar_select %p27, 0, %s26
    %s29 = ssub.s32 %s16, %s28
    %s30 = ssub.s32 %s17, %s24
    %s31 = sor.u32 %s29, %s30
    %p32 = scmp.eq.s32.totalorder %s31, 0
    %s34 = sadd.s32 %s33, 1
    %s35 = scalar_select %p32, %s33, %s34
    %p38 = pneg %p32
    %p39 = scmp.eq.s32.totalorder %s9, 1
    %p40 = por %p38, %p39
    %p41 = scmp.ne.s32.totalorder %s33, %s36
    %p42 = scmp.eq.s32.totalorder %s9, 0
    %p43 = por %p41, %p42
    %p44 = scmp.ne.s32.totalorder %s33, %s36
    %p45 = scmp.eq.s32.totalorder %s14, 1
    %p46 = por %p44, %p45
    %p47 = scmp.ne.s32.totalorder %s36, %s37
    %p48 = scmp.eq.s32.totalorder %s14, 0
    %p49 = por %p47, %p48
    %p50 = scmp.ne.s32.totalorder %s36, %s37
    %p51 = scmp.eq.s32.totalorder %s15, 1
    %p52 = por %p50, %p51
    %p54 = scmp.ne.s32.totalorder %s37, %s53
    %p55 = scmp.eq.s32.totalorder %s15, 0
    %p56 = por %p54, %p55
    %s58 = sadd.s32 %s57, 1
    %p61 = scmp.eq.s32.totalorder %s9, 1
    %p62 = scmp.ne.s32.totalorder %s57, %s59
    %p63 = scmp.eq.s32.totalorder %s9, 0
    %p64 = por %p62, %p63
    %p65 = scmp.ne.s32.totalorder %s57, %s59
    %p66 = scmp.eq.s32.totalorder %s14, 1
    %p67 = por %p65, %p66
    %p68 = scmp.ne.s32.totalorder %s59, %s60
    %p69 = scmp.eq.s32.totalorder %s14, 0
    %p70 = por %p68, %p69
    %p71 = scmp.ne.s32.totalorder %s59, %s60
    %p72 = scmp.eq.s32.totalorder %s15, 1
    %p73 = por %p71, %p72
    %p75 = scmp.ne.s32.totalorder %s60, %s74
    %p76 = scmp.eq.s32.totalorder %s15, 0
    %p77 = por %p75, %p76
    %s79 = sadd.s32 %s78, 1
    %p82 = scmp.eq.s32.totalorder %s9, 1
    %p83 = scmp.ne.s32.totalorder %s78, %s80
    %p84 = scmp.eq.s32.totalorder %s9, 0
    %p85 = por %p83, %p84
    %p86 = scmp.ne.s32.totalorder %s78, %s80
    %p87 = scmp.eq.s32.totalorder %s14, 1
    %p88 = por %p86, %p87
    %p89 = scmp.ne.s32.totalorder %s80, %s81
    %p90 = scmp.eq.s32.totalorder %s14, 0
    %p91 = por %p89, %p90
    %p92 = scmp.ne.s32.totalorder %s80, %s81
    %p93 = scmp.eq.s32.totalorder %s15, 1
    %p94 = por %p92, %p93
    %p96 = scmp.ne.s32.totalorder %s81, %s95
    %p97 = scmp.eq.s32.totalorder %s15, 0
    %p98 = por %p96, %p97
    %s99 = ssub.s32 %s16, %s28
    %s100 = ssub.s32 %s17, %s24
    %s101 = sor.u32 %s99, %s100
    %p102 = scmp.eq.s32.totalorder %s101, 0
    %s104 = sadd.s32 %s103, 1
    %s105 = scalar_select %p102, %s103, %s104
    %p108 = pneg %p102
    %p109 = scmp.eq.s32.totalorder %s9, 1
    %p110 = por %p108, %p109
    %p111 = scmp.ne.s32.totalorder %s103, %s106
    %p112 = scmp.eq.s32.totalorder %s9, 0
    %p113 = por %p111, %p112
    %p114 = scmp.ne.s32.totalorder %s103, %s106
    %p115 = scmp.eq.s32.totalorder %s14, 1
    %p116 = por %p114, %p115
    %p117 = scmp.ne.s32.totalorder %s106, %s107
    %p118 = scmp.eq.s32.totalorder %s14, 0
    %p119 = por %p117, %p118
    %p120 = scmp.ne.s32.totalorder %s106, %s107
    %p121 = scmp.eq.s32.totalorder %s15, 1
    %p122 = por %p120, %p121
    %p124 = scmp.ne.s32.totalorder %s107, %s123
    %p125 = scmp.eq.s32.totalorder %s15, 0
    %p126 = por %p124, %p125
    %p127 = scmp.le.s32.totalorder 1, %s9
    %p128 = scmp.lt.s32.totalorder %s9, 3
    %p129 = pnand %p127, %p128
    %p130 = pneg %p129
    // Predicated region
    $region9: #{up_block_forward.2} parent=5 // pred_check
      _
    $region10: #{up_block_forward.2} parent=5 // pred_check_branch
      %132 = sbr.rel (%p129) target = $region12
    $region11: #{up_block_forward.2} parent=5 // pred_region
      %s133 = ssub.s32 %s9, 1
      // Predicated region
      $region13: #{up_block_forward.2} parent=11 // pred_check
        %p134 = pneg %p70
      $region14: #{up_block_forward.2} parent=11 // pred_check_branch
        %136 = sbr.rel (%p134) target = $region16
      $region15: #{up_block_forward.2} parent=11 // pred_region
        _
      $region16: #{up_block_forward.2} parent=11 // pred_fallthru
        _
      // Predicated region
      $region17: #{up_block_forward.2} parent=11 // pred_check
        %p137 = pneg %p91
      $region18: #{up_block_forward.2} parent=11 // pred_check_branch
        %139 = sbr.rel (%p137) target = $region20
      $region19: #{up_block_forward.2} parent=11 // pred_region
        _
      $region20: #{up_block_forward.2} parent=11 // pred_fallthru
        _
    $region12: #{up_block_forward.2} parent=5 // pred_fallthru
      _
    %p140 = scmp.lt.s32.totalorder %s9, 2
    // Predicated region
    $region21: #{up_block_forward.2} parent=5 // pred_check
      %p141 = pneg %p140
    $region22: #{up_block_forward.2} parent=5 // pred_check_branch
      %143 = sbr.rel (%p141) target = $region24
    $region23: #{up_block_forward.2} parent=5 // pred_region
      // Predicated region
      $region25: #{up_block_forward.2} parent=23 // pred_check
        %p144 = pneg %p43
      $region26: #{up_block_forward.2} parent=23 // pred_check_branch
        %146 = sbr.rel (%p144) target = $region28
      $region27: #{up_block_forward.2} parent=23 // pred_region
        %p147 = scmp.lt.s32.totalorder %s16, 1
        %s148 = scalar_select %p147, %s16, 1
        %p149 = scmp.lt.s32.totalorder %s17, 0
        %s150 = scalar_select %p149, %s17, 0
        %s151 = sadd.s32 %s150, %s148
        %s152 = smul.addr %s151, 8
        %s153 = scalar_lea.vmem %s0, %s152
      $region28: #{up_block_forward.2} parent=23 // pred_fallthru
        _
    $region24: #{up_block_forward.2} parent=5 // pred_fallthru
      _
    %p154 = scmp.le.s32.totalorder 1, %s9
    %p155 = scmp.lt.s32.totalorder %s9, 3
    %p156 = pnand %p154, %p155
    %p157 = pneg %p156
    // Predicated region
    $region29: #{up_block_forward.2} parent=5 // pred_check
      _
    $region30: #{up_block_forward.2} parent=5 // pred_check_branch
      %159 = sbr.rel (%p156) target = $region32
    $region31: #{up_block_forward.2} parent=5 // pred_region
      %s160 = ssub.s32 %s9, 1
      %p161 = scmp.lt.s32.totalorder %s18, 1
      %s162 = scalar_select %p161, %s18, 1
      %p163 = scmp.lt.s32.totalorder %s19, 0
      %s164 = scalar_select %p163, %s19, 0
      %s165 = sadd.s32 %s164, %s162
      %s166 = smul.addr %s165, 8
      %s167 = scalar_lea.vmem %s0, %s166
      %p168 = pneg %p49
      %p169 = pneg %p46
      %p170 = pneg %p70
      %p171 = pneg %p67
      %p172 = pneg %p91
      %p173 = pneg %p88
      %p174 = pneg %p119
      %p175 = pneg %p116
      %p176 = scmp.lt.s32.totalorder %s18, 1
      %s177 = scalar_select %p176, %s18, 1
      %p178 = scmp.lt.s32.totalorder %s19, 0
      %s179 = scalar_select %p178, %s19, 0
      %s180 = smul.addr %s177, 2
      %s181 = sadd.s32 %s179, %s180
      %s182 = smul.addr %s181, 4
      %s183 = scalar_lea.vmem %s3, %s182
      %p184 = scmp.lt.s32.totalorder %s18, 1
      %s185 = scalar_select %p184, %s18, 1
      %p186 = scmp.lt.s32.totalorder %s19, 0
      %s187 = scalar_select %p186, %s19, 0
      %s188 = sadd.s32 %s187, %s185
      %s189 = smul.addr %s188, 8
      %s190 = scalar_lea.vmem %s0, %s189
      %p191 = scmp.lt.s32.totalorder %s18, 1
      %s192 = scalar_select %p191, %s18, 1
      %p193 = scmp.lt.s32.totalorder %s19, 0
      %s194 = scalar_select %p193, %s19, 0
      %s195 = smul.addr %s192, 2
      %s196 = sadd.s32 %s194, %s195
      %s197 = smul.addr %s196, 4
      %s198 = scalar_lea.vmem %s3, %s197
      %v200 = vld [vmem:[%s190] sm:$0xff]
      %v201 = vpack.c.bf16 %v200, %v200
      %v202 = vld [vmem:[%s1] sm:$0xf]
      %v203 = vld [vmem:[%s1 + $0x4] sm:$0xf]
      %v204 = vld [vmem:[%s2] sm:$0xff]
      %v205 = vld [vmem:[%s2 + $0x8] sm:$0xff]
      %207 = vset.pattern.permute.xlu0 0
      %208 = vperm.xlu0 %207, %v204
      %v209 = vpop.permute.xlu0 %208
      %212 = vset.pattern.permute.xlu0 0
      %213 = vperm.xlu0 %212, %v205
      %v214 = vpop.permute.xlu0 %213
      %v218 = vunpack.c.l.b16 %v202
      %v219 = vunpack.c.l.b16 %v203
      %v220 = vpack.c.b16 %v219, %v218
      %vm221 = vcmask 64512
      %v223 = vsel %vm221, %v220, 0
      %vm225 = vcmask 1043456
      %v227 = vsel %vm225, %v201, 0
      %229 = vmatprep.subr.bf16.mxu0 0
      %230 = vmatpush1.bf16.msra.mxu0 %v227
      %231 = vmatprep.subr.bf16.mxu0 0
      %232 = vmatpush1.bf16.msra.mxu0 0
      %233 = vmatprep.subr.bf16.mxu0 0
      %234 = vmatpush1.bf16.msra.mxu0 0
      %235 = vmatprep.subr.bf16.mxu0 0
      %236 = vmatpush1.bf16.msra.mxu0 0
      %237 = vmatprep.subr.bf16.mxu0 0
      %238 = vmatpush1.bf16.msra.mxu0 0
      %239 = vmatprep.subr.bf16.mxu0 0
      %240 = vmatpush1.bf16.msra.mxu0 0
      %241 = vmatprep.subr.bf16.mxu0 0
      %242 = vmatpush1.bf16.msra.mxu0 0
      %243 = vmatprep.subr.bf16.mxu0 0
      %244 = vmatpush1.bf16.msra.mxu0 0
      %245 = vmatprep.subr.bf16.mxu0 0
      %246 = vmatpush1.bf16.msra.mxu0 0
      %247 = vmatprep.subr.bf16.mxu0 0
      %248 = vmatpush1.bf16.msra.mxu0 0
      %249 = vmatprep.subr.bf16.mxu0 0
      %250 = vmatpush1.bf16.msra.mxu0 0
      %251 = vmatprep.subr.bf16.mxu0 0
      %252 = vmatpush1.bf16.msra.mxu0 0
      %253 = vmatprep.subr.bf16.mxu0 0
      %254 = vmatpush1.bf16.msra.mxu0 0
      %255 = vmatprep.subr.bf16.mxu0 0
      %256 = vmatpush1.bf16.msra.mxu0 0
      %257 = vmatprep.subr.bf16.mxu0 0
      %258 = vmatpush1.bf16.msra.mxu0 0
      %259 = vmatprep.subr.bf16.mxu0 0
      %260 = vmatpush1.bf16.msra.mxu0 0
      %261 = vmatprep.mubr.bf16.mxu0 0
      %262 = vmatmul.mubr.bf16.gmra.mrb[0].mxu0 %v223
      %v263 = vpop.f32.mrb[0].mxu0
      %v264 = vadd.f32 %v209, %v263
      %v265 = vpop.f32.mrb[0].mxu0
      %v266 = vpop.f32.mrb[0].mxu0
      %v267 = vadd.f32 %v214, %v266
      %v268 = vpop.f32.mrb[0].mxu0
      %269 = vdwg.mxu0
      %v270 = vpack.c.bf16 %v267, %v264
      %v272 = vunpack.c.l.b16 %v270
      %v273 = vunpack.c.h.b16 %v270
      %v274 = vpack.c.b16 %v272, %v272
      %v275 = vpack.c.b16 %v273, %v273
      %vm278 = vcmask 519168
      %279 = vst.msk [vmem:[%s198] sm:$0xf] %vm278, %v274
      %280 = vst.msk [vmem:[%s198 + $0x4] sm:$0xf] %vm278, %v275
      %p281 = scmp.lt.s32.totalorder %s18, 1
      %s282 = scalar_select %p281, %s18, 1
      %p283 = scmp.lt.s32.totalorder %s19, 0
      %s284 = scalar_select %p283, %s19, 0
      %s285 = smul.addr %s282, 2
      %s286 = sadd.s32 %s284, %s285
      %s287 = smul.addr %s286, 4
      %s288 = scalar_lea.vmem %s3, %s287
      // Predicated region
      $region33: #{up_block_forward.2} parent=31 // pred_check
        %p289 = pneg %p116
      $region34: #{up_block_forward.2} parent=31 // pred_check_branch
        %291 = sbr.rel (%p289) target = $region36
      $region35: #{up_block_forward.2} parent=31 // pred_region
        _
      $region36: #{up_block_forward.2} parent=31 // pred_fallthru
        _
    $region32: #{up_block_forward.2} parent=5 // pred_fallthru
      _
    %p292 = scmp.le.s32.totalorder 2, %s9
    // Predicated region
    $region37: #{up_block_forward.2} parent=5 // pred_check
      %p293 = pneg %p292
    $region38: #{up_block_forward.2} parent=5 // pred_check_branch
      %295 = sbr.rel (%p293) target = $region40
    $region39: #{up_block_forward.2} parent=5 // pred_region
      %s296 = ssub.s32 %s9, 2
      // Predicated region
      $region41: #{up_block_forward.2} parent=39 // pred_check
        %p297 = pneg %p122
      $region42: #{up_block_forward.2} parent=39 // pred_check_branch
        %299 = sbr.rel (%p297) target = $region44
      $region43: #{up_block_forward.2} parent=39 // pred_region
        %p300 = scmp.lt.s32.totalorder %s20, 1
        %s301 = scalar_select %p300, %s20, 1
        %p302 = scmp.lt.s32.totalorder %s21, 0
        %s303 = scalar_select %p302, %s21, 0
        %s304 = smul.addr %s301, 2
        %s305 = sadd.s32 %s303, %s304
        %s306 = smul.addr %s305, 4
        %s307 = scalar_lea.vmem %s3, %s306
      $region44: #{up_block_forward.2} parent=39 // pred_fallthru
        _
    $region40: #{up_block_forward.2} parent=5 // pred_fallthru
      _
  $region6: #{up_block_forward.2} parent=0 // loop_footer
    %s13 = sadd.s32 1, %s9
  $region7: #{up_block_forward.2} parent=0 // loop_footer_branch
    %8 = sbr.rel target = $region3
  $region8: #{up_block_forward.2} parent=0 // loop_exit
    _

// kernel: up_block_forward.3
$region0: #{up_block_forward.3}
  #allocation0 [shape = 'u32[]', space=smem, size = 0x4, offset = 0x4, fixed_abs, tag = 'smem constant byte address 0x4 - core index']
  #allocation1 [shape = 'u32[144,128]{1,0:T(1,128)}', space=vmem, size = 0x12000, scoped, tag = 'internal scratch']
  #allocation2 [shape = 'f32[1,1]{1,0:T(1,128)S(1)}', space=vmem, size = 0x200, scoped, tag = 'scoped memory for up_block_forward.3']
  %s0 = inlined_call_operand.vmem [shape: bf16[2,4,324], index: 0, kind: input, shape index: {}]
  %s1 = inlined_call_operand.vmem [shape: bf16[2,4,324], index: 1, kind: input, shape index: {}]
  %s2 = inlined_call_operand.vmem [shape: bf16[2,4], index: 2, kind: input, shape index: {}]
  %s3 = inlined_call_operand.vmem [shape: f32[2,1], index: 3, kind: input, shape index: {}]
  %s4 = inlined_call_operand.vmem [shape: bf16[2,4], index: 4, kind: input, shape index: {}]
  %s5 = inlined_call_operand.vmem [shape: f32[2,1], index: 5, kind: input, shape index: {}]
  %s6 = inlined_call_operand.vmem [shape: f32[2,1], index: 6, kind: input, shape index: {}]
  %s7 = inlined_call_operand.<no memory space> [shape: f32[1,1], index: 7, kind: input, shape index: {}]
  %s8 = inlined_call_operand.vmem [shape: bf16[4,72], index: 8, kind: input, shape index: {}]
  %s9 = inlined_call_operand.vmem [shape: f32[4,1], index: 9, kind: input, shape index: {}]
  %s10 = inlined_call_operand.vmem [shape: bf16[4,36], index: 10, kind: input, shape index: {}]
  %s11 = inlined_call_operand.vmem [shape: f32[4,1], index: 11, kind: input, shape index: {}]
  %s12 = inlined_call_operand.vmem [shape: bf16[4,8], index: 12, kind: input, shape index: {}]
  %s13 = inlined_call_operand.vmem [shape: f32[4,1], index: 13, kind: input, shape index: {}]
  %s14 = inlined_call_operand.vmem [shape: f32[2,4,256], index: 14, kind: output, shape index: {}]
  %s15 = sld [smem:[#allocation0]]
  $region89: #{up_block_forward.3} parent=0
    _
  %s17 = ssub.s32 1, %s15
  %s18 = scalar_select 0, %s17, %s15
  %v19 = vstv %s7
  %20 = vst [vmem:[#allocation2] sm:$0x1] %v19
  loop: start=0, step=1, limit=4
  $region2: #{up_block_forward.3} parent=0 // loop_pre_header
    _
  $region3: #{up_block_forward.3} parent=0 // loop_header
    %s22 = sphi 0, %s26
    %p23 = scmp.ge.s32.totalorder %s22, 4
    %s32 = sphi 0, %s34
    %s35 = sphi 0, %s32
    %s36 = sphi 0, %s35
    %s52 = sphi 0, %s36
    %s58 = sphi 0, %s60
    %s61 = sphi 0, %s58
    %s62 = sphi 0, %s61
    %s78 = sphi 0, %s62
    %s82 = sphi 0, %s82
    %s84 = sphi 0, %s82
    %s85 = sphi 0, %s84
    %s99 = sphi 0, %s85
    %s103 = sphi 0, %s103
    %s105 = sphi 0, %s103
    %s106 = sphi 0, %s105
    %s120 = sphi 0, %s106
    %s124 = sphi 0, %s124
    %s126 = sphi 0, %s124
    %s127 = sphi 0, %s126
    %s141 = sphi 0, %s127
    %s145 = sphi 0, %s145
    %s147 = sphi 0, %s145
    %s148 = sphi 0, %s147
    %s162 = sphi 0, %s148
    %s166 = sphi 0, %s166
    %s168 = sphi 0, %s166
    %s169 = sphi 0, %s168
    %s183 = sphi 0, %s169
    %s187 = sphi 0, %s187
    %s189 = sphi 0, %s187
    %s190 = sphi 0, %s189
    %s204 = sphi 0, %s190
    %s208 = sphi 0, %s208
    %s210 = sphi 0, %s208
    %s211 = sphi 0, %s210
    %s225 = sphi 0, %s211
    %s229 = sphi 0, %s229
    %s231 = sphi 0, %s229
    %s232 = sphi 0, %s231
    %s246 = sphi 0, %s232
    %s250 = sphi 0, %s250
    %s252 = sphi 0, %s250
    %s253 = sphi 0, %s252
    %s267 = sphi 0, %s253
    %s271 = sphi 0, %s271
    %s273 = sphi 0, %s271
    %s274 = sphi 0, %s273
    %s288 = sphi 0, %s274
    %s292 = sphi 0, %s292
    %s294 = sphi 0, %s292
    %s295 = sphi 0, %s294
    %s309 = sphi 0, %s295
    %s313 = sphi 0, %s313
    %s315 = sphi 0, %s313
    %s316 = sphi 0, %s315
    %s330 = sphi 0, %s316
    %s336 = sphi 0, %s338
    %s339 = sphi 0, %s336
    %s340 = sphi 0, %s339
    %s356 = sphi 0, %s340
  $region4: #{up_block_forward.3} parent=0 // loop_header_branch
    %25 = sbr.rel (%p23) target = $region8
  $region5: #{up_block_forward.3} parent=0 // loop_body
    %s27 = ssub.s32 %s22, 1
    %s28 = ssub.s32 %s22, 2
    %s29 = sadd.s32 %s22, 1
    %s30 = ssub.s32 %s22, %s29
    %p31 = scmp.eq.s32.totalorder %s30, 0
    %s33 = sadd.s32 %s32, 1
    %s34 = scalar_select %p31, %s32, %s33
    %p37 = pneg %p31
    %p38 = scmp.eq.s32.totalorder %s22, 1
    %p39 = por %p37, %p38
    %p40 = scmp.ne.s32.totalorder %s32, %s35
    %p41 = scmp.eq.s32.totalorder %s22, 0
    %p42 = por %p40, %p41
    %p43 = scmp.ne.s32.totalorder %s32, %s35
    %p44 = scmp.eq.s32.totalorder %s27, 1
    %p45 = por %p43, %p44
    %p46 = scmp.ne.s32.totalorder %s35, %s36
    %p47 = scmp.eq.s32.totalorder %s27, 0
    %p48 = por %p46, %p47
    %p49 = scmp.ne.s32.totalorder %s35, %s36
    %p50 = scmp.eq.s32.totalorder %s28, 1
    %p51 = por %p49, %p50
    %p53 = scmp.ne.s32.totalorder %s36, %s52
    %p54 = scmp.eq.s32.totalorder %s28, 0
    %p55 = por %p53, %p54
    %s56 = ssub.s32 %s22, %s29
    %p57 = scmp.eq.s32.totalorder %s56, 0
    %s59 = sadd.s32 %s58, 1
    %s60 = scalar_select %p57, %s58, %s59
    %p63 = pneg %p57
    %p64 = scmp.eq.s32.totalorder %s22, 1
    %p65 = por %p63, %p64
    %p66 = scmp.ne.s32.totalorder %s58, %s61
    %p67 = scmp.eq.s32.totalorder %s22, 0
    %p68 = por %p66, %p67
    %p69 = scmp.ne.s32.totalorder %s58, %s61
    %p70 = scmp.eq.s32.totalorder %s27, 1
    %p71 = por %p69, %p70
    %p72 = scmp.ne.s32.totalorder %s61, %s62
    %p73 = scmp.eq.s32.totalorder %s27, 0
    %p74 = por %p72, %p73
    %p75 = scmp.ne.s32.totalorder %s61, %s62
    %p76 = scmp.eq.s32.totalorder %s28, 1
    %p77 = por %p75, %p76
    %p79 = scmp.ne.s32.totalorder %s62, %s78
    %p80 = scmp.eq.s32.totalorder %s28, 0
    %p81 = por %p79, %p80
    %s83 = sadd.s32 %s82, 1
    %p86 = scmp.eq.s32.totalorder %s22, 1
    %p87 = scmp.ne.s32.totalorder %s82, %s84
    %p88 = scmp.eq.s32.totalorder %s22, 0
    %p89 = por %p87, %p88
    %p90 = scmp.ne.s32.totalorder %s82, %s84
    %p91 = scmp.eq.s32.totalorder %s27, 1
    %p92 = por %p90, %p91
    %p93 = scmp.ne.s32.totalorder %s84, %s85
    %p94 = scmp.eq.s32.totalorder %s27, 0
    %p95 = por %p93, %p94
    %p96 = scmp.ne.s32.totalorder %s84, %s85
    %p97 = scmp.eq.s32.totalorder %s28, 1
    %p98 = por %p96, %p97
    %p100 = scmp.ne.s32.totalorder %s85, %s99
    %p101 = scmp.eq.s32.totalorder %s28, 0
    %p102 = por %p100, %p101
    %s104 = sadd.s32 %s103, 1
    %p107 = scmp.eq.s32.totalorder %s22, 1
    %p108 = scmp.ne.s32.totalorder %s103, %s105
    %p109 = scmp.eq.s32.totalorder %s22, 0
    %p110 = por %p108, %p109
    %p111 = scmp.ne.s32.totalorder %s103, %s105
    %p112 = scmp.eq.s32.totalorder %s27, 1
    %p113 = por %p111, %p112
    %p114 = scmp.ne.s32.totalorder %s105, %s106
    %p115 = scmp.eq.s32.totalorder %s27, 0
    %p116 = por %p114, %p115
    %p117 = scmp.ne.s32.totalorder %s105, %s106
    %p118 = scmp.eq.s32.totalorder %s28, 1
    %p119 = por %p117, %p118
    %p121 = scmp.ne.s32.totalorder %s106, %s120
    %p122 = scmp.eq.s32.totalorder %s28, 0
    %p123 = por %p121, %p122
    %s125 = sadd.s32 %s124, 1
    %p128 = scmp.eq.s32.totalorder %s22, 1
    %p129 = scmp.ne.s32.totalorder %s124, %s126
    %p130 = scmp.eq.s32.totalorder %s22, 0
    %p131 = por %p129, %p130
    %p132 = scmp.ne.s32.totalorder %s124, %s126
    %p133 = scmp.eq.s32.totalorder %s27, 1
    %p134 = por %p132, %p133
    %p135 = scmp.ne.s32.totalorder %s126, %s127
    %p136 = scmp.eq.s32.totalorder %s27, 0
    %p137 = por %p135, %p136
    %p138 = scmp.ne.s32.totalorder %s126, %s127
    %p139 = scmp.eq.s32.totalorder %s28, 1
    %p140 = por %p138, %p139
    %p142 = scmp.ne.s32.totalorder %s127, %s141
    %p143 = scmp.eq.s32.totalorder %s28, 0
    %p144 = por %p142, %p143
    %s146 = sadd.s32 %s145, 1
    %p149 = scmp.eq.s32.totalorder %s22, 1
    %p150 = scmp.ne.s32.totalorder %s145, %s147
    %p151 = scmp.eq.s32.totalorder %s22, 0
    %p152 = por %p150, %p151
    %p153 = scmp.ne.s32.totalorder %s145, %s147
    %p154 = scmp.eq.s32.totalorder %s27, 1
    %p155 = por %p153, %p154
    %p156 = scmp.ne.s32.totalorder %s147, %s148
    %p157 = scmp.eq.s32.totalorder %s27, 0
    %p158 = por %p156, %p157
    %p159 = scmp.ne.s32.totalorder %s147, %s148
    %p160 = scmp.eq.s32.totalorder %s28, 1
    %p161 = por %p159, %p160
    %p163 = scmp.ne.s32.totalorder %s148, %s162
    %p164 = scmp.eq.s32.totalorder %s28, 0
    %p165 = por %p163, %p164
    %s167 = sadd.s32 %s166, 1
    %p170 = scmp.eq.s32.totalorder %s22, 1
    %p171 = scmp.ne.s32.totalorder %s166, %s168
    %p172 = scmp.eq.s32.totalorder %s22, 0
    %p173 = por %p171, %p172
    %p174 = scmp.ne.s32.totalorder %s166, %s168
    %p175 = scmp.eq.s32.totalorder %s27, 1
    %p176 = por %p174, %p175
    %p177 = scmp.ne.s32.totalorder %s168, %s169
    %p178 = scmp.eq.s32.totalorder %s27, 0
    %p179 = por %p177, %p178
    %p180 = scmp.ne.s32.totalorder %s168, %s169
    %p181 = scmp.eq.s32.totalorder %s28, 1
    %p182 = por %p180, %p181
    %p184 = scmp.ne.s32.totalorder %s169, %s183
    %p185 = scmp.eq.s32.totalorder %s28, 0
    %p186 = por %p184, %p185
    %s188 = sadd.s32 %s187, 1
    %p191 = scmp.eq.s32.totalorder %s22, 1
    %p192 = scmp.ne.s32.totalorder %s187, %s189
    %p193 = scmp.eq.s32.totalorder %s22, 0
    %p194 = por %p192, %p193
    %p195 = scmp.ne.s32.totalorder %s187, %s189
    %p196 = scmp.eq.s32.totalorder %s27, 1
    %p197 = por %p195, %p196
    %p198 = scmp.ne.s32.totalorder %s189, %s190
    %p199 = scmp.eq.s32.totalorder %s27, 0
    %p200 = por %p198, %p199
    %p201 = scmp.ne.s32.totalorder %s189, %s190
    %p202 = scmp.eq.s32.totalorder %s28, 1
    %p203 = por %p201, %p202
    %p205 = scmp.ne.s32.totalorder %s190, %s204
    %p206 = scmp.eq.s32.totalorder %s28, 0
    %p207 = por %p205, %p206
    %s209 = sadd.s32 %s208, 1
    %p212 = scmp.eq.s32.totalorder %s22, 1
    %p213 = scmp.ne.s32.totalorder %s208, %s210
    %p214 = scmp.eq.s32.totalorder %s22, 0
    %p215 = por %p213, %p214
    %p216 = scmp.ne.s32.totalorder %s208, %s210
    %p217 = scmp.eq.s32.totalorder %s27, 1
    %p218 = por %p216, %p217
    %p219 = scmp.ne.s32.totalorder %s210, %s211
    %p220 = scmp.eq.s32.totalorder %s27, 0
    %p221 = por %p219, %p220
    %p222 = scmp.ne.s32.totalorder %s210, %s211
    %p223 = scmp.eq.s32.totalorder %s28, 1
    %p224 = por %p222, %p223
    %p226 = scmp.ne.s32.totalorder %s211, %s225
    %p227 = scmp.eq.s32.totalorder %s28, 0
    %p228 = por %p226, %p227
    %s230 = sadd.s32 %s229, 1
    %p233 = scmp.eq.s32.totalorder %s22, 1
    %p234 = scmp.ne.s32.totalorder %s229, %s231
    %p235 = scmp.eq.s32.totalorder %s22, 0
    %p236 = por %p234, %p235
    %p237 = scmp.ne.s32.totalorder %s229, %s231
    %p238 = scmp.eq.s32.totalorder %s27, 1
    %p239 = por %p237, %p238
    %p240 = scmp.ne.s32.totalorder %s231, %s232
    %p241 = scmp.eq.s32.totalorder %s27, 0
    %p242 = por %p240, %p241
    %p243 = scmp.ne.s32.totalorder %s231, %s232
    %p244 = scmp.eq.s32.totalorder %s28, 1
    %p245 = por %p243, %p244
    %p247 = scmp.ne.s32.totalorder %s232, %s246
    %p248 = scmp.eq.s32.totalorder %s28, 0
    %p249 = por %p247, %p248
    %s251 = sadd.s32 %s250, 1
    %p254 = scmp.eq.s32.totalorder %s22, 1
    %p255 = scmp.ne.s32.totalorder %s250, %s252
    %p256 = scmp.eq.s32.totalorder %s22, 0
    %p257 = por %p255, %p256
    %p258 = scmp.ne.s32.totalorder %s250, %s252
    %p259 = scmp.eq.s32.totalorder %s27, 1
    %p260 = por %p258, %p259
    %p261 = scmp.ne.s32.totalorder %s252, %s253
    %p262 = scmp.eq.s32.totalorder %s27, 0
    %p263 = por %p261, %p262
    %p264 = scmp.ne.s32.totalorder %s252, %s253
    %p265 = scmp.eq.s32.totalorder %s28, 1
    %p266 = por %p264, %p265
    %p268 = scmp.ne.s32.totalorder %s253, %s267
    %p269 = scmp.eq.s32.totalorder %s28, 0
    %p270 = por %p268, %p269
    %s272 = sadd.s32 %s271, 1
    %p275 = scmp.eq.s32.totalorder %s22, 1
    %p276 = scmp.ne.s32.totalorder %s271, %s273
    %p277 = scmp.eq.s32.totalorder %s22, 0
    %p278 = por %p276, %p277
    %p279 = scmp.ne.s32.totalorder %s271, %s273
    %p280 = scmp.eq.s32.totalorder %s27, 1
    %p281 = por %p279, %p280
    %p282 = scmp.ne.s32.totalorder %s273, %s274
    %p283 = scmp.eq.s32.totalorder %s27, 0
    %p284 = por %p282, %p283
    %p285 = scmp.ne.s32.totalorder %s273, %s274
    %p286 = scmp.eq.s32.totalorder %s28, 1
    %p287 = por %p285, %p286
    %p289 = scmp.ne.s32.totalorder %s274, %s288
    %p290 = scmp.eq.s32.totalorder %s28, 0
    %p291 = por %p289, %p290
    %s293 = sadd.s32 %s292, 1
    %p296 = scmp.eq.s32.totalorder %s22, 1
    %p297 = scmp.ne.s32.totalorder %s292, %s294
    %p298 = scmp.eq.s32.totalorder %s22, 0
    %p299 = por %p297, %p298
    %p300 = scmp.ne.s32.totalorder %s292, %s294
    %p301 = scmp.eq.s32.totalorder %s27, 1
    %p302 = por %p300, %p301
    %p303 = scmp.ne.s32.totalorder %s294, %s295
    %p304 = scmp.eq.s32.totalorder %s27, 0
    %p305 = por %p303, %p304
    %p306 = scmp.ne.s32.totalorder %s294, %s295
    %p307 = scmp.eq.s32.totalorder %s28, 1
    %p308 = por %p306, %p307
    %p310 = scmp.ne.s32.totalorder %s295, %s309
    %p311 = scmp.eq.s32.totalorder %s28, 0
    %p312 = por %p310, %p311
    %s314 = sadd.s32 %s313, 1
    %p317 = scmp.eq.s32.totalorder %s22, 1
    %p318 = scmp.ne.s32.totalorder %s313, %s315
    %p319 = scmp.eq.s32.totalorder %s22, 0
    %p320 = por %p318, %p319
    %p321 = scmp.ne.s32.totalorder %s313, %s315
    %p322 = scmp.eq.s32.totalorder %s27, 1
    %p323 = por %p321, %p322
    %p324 = scmp.ne.s32.totalorder %s315, %s316
    %p325 = scmp.eq.s32.totalorder %s27, 0
    %p326 = por %p324, %p325
    %p327 = scmp.ne.s32.totalorder %s315, %s316
    %p328 = scmp.eq.s32.totalorder %s28, 1
    %p329 = por %p327, %p328
    %p331 = scmp.ne.s32.totalorder %s316, %s330
    %p332 = scmp.eq.s32.totalorder %s28, 0
    %p333 = por %p331, %p332
    %s334 = ssub.s32 %s22, %s29
    %p335 = scmp.eq.s32.totalorder %s334, 0
    %s337 = sadd.s32 %s336, 1
    %s338 = scalar_select %p335, %s336, %s337
    %p341 = pneg %p335
    %p342 = scmp.eq.s32.totalorder %s22, 1
    %p343 = por %p341, %p342
    %p344 = scmp.ne.s32.totalorder %s336, %s339
    %p345 = scmp.eq.s32.totalorder %s22, 0
    %p346 = por %p344, %p345
    %p347 = scmp.ne.s32.totalorder %s336, %s339
    %p348 = scmp.eq.s32.totalorder %s27, 1
    %p349 = por %p347, %p348
    %p350 = scmp.ne.s32.totalorder %s339, %s340
    %p351 = scmp.eq.s32.totalorder %s27, 0
    %p352 = por %p350, %p351
    %p353 = scmp.ne.s32.totalorder %s339, %s340
    %p354 = scmp.eq.s32.totalorder %s28, 1
    %p355 = por %p353, %p354
    %p357 = scmp.ne.s32.totalorder %s340, %s356
    %p358 = scmp.eq.s32.totalorder %s28, 0
    %p359 = por %p357, %p358
    %p360 = scmp.le.s32.totalorder 1, %s22
    %p361 = scmp.lt.s32.totalorder %s22, 3
    %p362 = pnand %p360, %p361
    %p363 = pneg %p362
    // Predicated region
    $region9: #{up_block_forward.3} parent=5 // pred_check
      _
    $region10: #{up_block_forward.3} parent=5 // pred_check_branch
      %365 = sbr.rel (%p362) target = $region12
    $region11: #{up_block_forward.3} parent=5 // pred_region
      %s366 = ssub.s32 %s22, 1
      // Predicated region
      $region13: #{up_block_forward.3} parent=11 // pred_check
        %p367 = pneg %p95
      $region14: #{up_block_forward.3} parent=11 // pred_check_branch
        %369 = sbr.rel (%p367) target = $region16
      $region15: #{up_block_forward.3} parent=11 // pred_region
        _
      $region16: #{up_block_forward.3} parent=11 // pred_fallthru
        _
      // Predicated region
      $region17: #{up_block_forward.3} parent=11 // pred_check
        %p370 = pneg %p116
      $region18: #{up_block_forward.3} parent=11 // pred_check_branch
        %372 = sbr.rel (%p370) target = $region20
      $region19: #{up_block_forward.3} parent=11 // pred_region
        _
      $region20: #{up_block_forward.3} parent=11 // pred_fallthru
        _
      // Predicated region
      $region21: #{up_block_forward.3} parent=11 // pred_check
        %p373 = pneg %p137
      $region22: #{up_block_forward.3} parent=11 // pred_check_branch
        %375 = sbr.rel (%p373) target = $region24
      $region23: #{up_block_forward.3} parent=11 // pred_region
        _
      $region24: #{up_block_forward.3} parent=11 // pred_fallthru
        _
      // Predicated region
      $region25: #{up_block_forward.3} parent=11 // pred_check
        %p376 = pneg %p158
      $region26: #{up_block_forward.3} parent=11 // pred_check_branch
        %378 = sbr.rel (%p376) target = $region28
      $region27: #{up_block_forward.3} parent=11 // pred_region
        _
      $region28: #{up_block_forward.3} parent=11 // pred_fallthru
        _
      // Predicated region
      $region29: #{up_block_forward.3} parent=11 // pred_check
        %p379 = pneg %p179
      $region30: #{up_block_forward.3} parent=11 // pred_check_branch
        %381 = sbr.rel (%p379) target = $region32
      $region31: #{up_block_forward.3} parent=11 // pred_region
        _
      $region32: #{up_block_forward.3} parent=11 // pred_fallthru
        _
      // Predicated region
      $region33: #{up_block_forward.3} parent=11 // pred_check
        %p382 = pneg %p200
      $region34: #{up_block_forward.3} parent=11 // pred_check_branch
        %384 = sbr.rel (%p382) target = $region36
      $region35: #{up_block_forward.3} parent=11 // pred_region
        _
      $region36: #{up_block_forward.3} parent=11 // pred_fallthru
        _
      // Predicated region
      $region37: #{up_block_forward.3} parent=11 // pred_check
        %p385 = pneg %p221
      $region38: #{up_block_forward.3} parent=11 // pred_check_branch
        %387 = sbr.rel (%p385) target = $region40
      $region39: #{up_block_forward.3} parent=11 // pred_region
        _
      $region40: #{up_block_forward.3} parent=11 // pred_fallthru
        _
      // Predicated region
      $region41: #{up_block_forward.3} parent=11 // pred_check
        %p388 = pneg %p242
      $region42: #{up_block_forward.3} parent=11 // pred_check_branch
        %390 = sbr.rel (%p388) target = $region44
      $region43: #{up_block_forward.3} parent=11 // pred_region
        _
      $region44: #{up_block_forward.3} parent=11 // pred_fallthru
        _
      // Predicated region
      $region45: #{up_block_forward.3} parent=11 // pred_check
        %p391 = pneg %p263
      $region46: #{up_block_forward.3} parent=11 // pred_check_branch
        %393 = sbr.rel (%p391) target = $region48
      $region47: #{up_block_forward.3} parent=11 // pred_region
        _
      $region48: #{up_block_forward.3} parent=11 // pred_fallthru
        _
      // Predicated region
      $region49: #{up_block_forward.3} parent=11 // pred_check
        %p394 = pneg %p284
      $region50: #{up_block_forward.3} parent=11 // pred_check_branch
        %396 = sbr.rel (%p394) target = $region52
      $region51: #{up_block_forward.3} parent=11 // pred_region
        _
      $region52: #{up_block_forward.3} parent=11 // pred_fallthru
        _
      // Predicated region
      $region53: #{up_block_forward.3} parent=11 // pred_check
        %p397 = pneg %p305
      $region54: #{up_block_forward.3} parent=11 // pred_check_branch
        %399 = sbr.rel (%p397) target = $region56
      $region55: #{up_block_forward.3} parent=11 // pred_region
        _
      $region56: #{up_block_forward.3} parent=11 // pred_fallthru
        _
      // Predicated region
      $region57: #{up_block_forward.3} parent=11 // pred_check
        %p400 = pneg %p326
      $region58: #{up_block_forward.3} parent=11 // pred_check_branch
        %402 = sbr.rel (%p400) target = $region60
      $region59: #{up_block_forward.3} parent=11 // pred_region
        _
      $region60: #{up_block_forward.3} parent=11 // pred_fallthru
        _
    $region12: #{up_block_forward.3} parent=5 // pred_fallthru
      _
    %p403 = scmp.lt.s32.totalorder %s22, 2
    // Predicated region
    $region61: #{up_block_forward.3} parent=5 // pred_check
      %p404 = pneg %p403
    $region62: #{up_block_forward.3} parent=5 // pred_check_branch
      %406 = sbr.rel (%p404) target = $region64
    $region63: #{up_block_forward.3} parent=5 // pred_region
      // Predicated region
      $region65: #{up_block_forward.3} parent=63 // pred_check
        %p407 = pneg %p42
      $region66: #{up_block_forward.3} parent=63 // pred_check_branch
        %409 = sbr.rel (%p407) target = $region68
      $region67: #{up_block_forward.3} parent=63 // pred_region
        %p410 = scmp.lt.s32.totalorder %s22, 1
        %s411 = scalar_select %p410, %s22, 1
        %s412 = smul.addr %s411, 3
        %s413 = smul.addr %s412, 2
        %s414 = scalar_lea.vmem %s0, %s413
      $region68: #{up_block_forward.3} parent=63 // pred_fallthru
        _
      // Predicated region
      $region69: #{up_block_forward.3} parent=63 // pred_check
        %p415 = pneg %p68
      $region70: #{up_block_forward.3} parent=63 // pred_check_branch
        %417 = sbr.rel (%p415) target = $region72
      $region71: #{up_block_forward.3} parent=63 // pred_region
        %p418 = scmp.lt.s32.totalorder %s22, 1
        %s419 = scalar_select %p418, %s22, 1
        %s420 = smul.addr %s419, 3
        %s421 = smul.addr %s420, 2
        %s422 = scalar_lea.vmem %s1, %s421
      $region72: #{up_block_forward.3} parent=63 // pred_fallthru
        _
    $region64: #{up_block_forward.3} parent=5 // pred_fallthru
      _
    %p423 = scmp.le.s32.totalorder 1, %s22
    %p424 = scmp.lt.s32.totalorder %s22, 3
    %p425 = pnand %p423, %p424
    %p426 = pneg %p425
    // Predicated region
    $region73: #{up_block_forward.3} parent=5 // pred_check
      _
    $region74: #{up_block_forward.3} parent=5 // pred_check_branch
      %428 = sbr.rel (%p425) target = $region76
    $region75: #{up_block_forward.3} parent=5 // pred_region
      %s429 = ssub.s32 %s22, 1
      %p430 = scmp.lt.s32.totalorder %s27, 1
      %s431 = scalar_select %p430, %s27, 1
      %s432 = smul.addr %s431, 3
      %s433 = smul.addr %s432, 2
      %s434 = scalar_lea.vmem %s0, %s433
      %p435 = pneg %p48
      %p436 = pneg %p45
      %p437 = scmp.lt.s32.totalorder %s27, 1
      %s438 = scalar_select %p437, %s27, 1
      %s439 = smul.addr %s438, 3
      %s440 = smul.addr %s439, 2
      %s441 = scalar_lea.vmem %s1, %s440
      %p442 = pneg %p74
      %p443 = pneg %p71
      %p444 = pneg %p95
      %p445 = pneg %p92
      %p446 = pneg %p116
      %p447 = pneg %p113
      %p448 = pneg %p137
      %p449 = pneg %p134
      %p450 = pneg %p158
      %p451 = pneg %p155
      %p452 = pneg %p179
      %p453 = pneg %p176
      %p454 = pneg %p200
      %p455 = pneg %p197
      %p456 = pneg %p221
      %p457 = pneg %p218
      %p458 = pneg %p242
      %p459 = pneg %p239
      %p460 = pneg %p263
      %p461 = pneg %p260
      %p462 = pneg %p284
      %p463 = pneg %p281
      %p464 = pneg %p305
      %p465 = pneg %p302
      %p466 = pneg %p326
      %p467 = pneg %p323
      %p468 = pneg %p352
      %p469 = pneg %p349
      %p470 = scmp.lt.s32.totalorder %s27, 1
      %s471 = scalar_select %p470, %s27, 1
      %s472 = smul.addr %s471, 2
      %s473 = smul.addr %s472, 4
      %s474 = scalar_lea.vmem %s14, %s473
      %p475 = scmp.lt.s32.totalorder %s27, 1
      %s476 = scalar_select %p475, %s27, 1
      %s477 = smul.addr %s476, 3
      %s478 = smul.addr %s477, 2
      %s479 = scalar_lea.vmem %s0, %s478
      %p480 = scmp.lt.s32.totalorder %s27, 1
      %s481 = scalar_select %p480, %s27, 1
      %s482 = smul.addr %s481, 3
      %s483 = smul.addr %s482, 2
      %s484 = scalar_lea.vmem %s1, %s483
      %p485 = scmp.lt.s32.totalorder %s27, 1
      %s486 = scalar_select %p485, %s27, 1
      %s487 = smul.addr %s486, 2
      %s488 = smul.addr %s487, 4
      %s489 = scalar_lea.vmem %s14, %s488
      %v491 = vld [vmem:[%s479] sm:$0x3f]
      %v492 = vld [vmem:[%s484] sm:$0x3f]
      %v493 = vld [vmem:[%s2] sm:$0x1]
      %v494 = vld [vmem:[%s3] sm:$0x3]
      %496 = vset.pattern.permute.xlu0 0
      %497 = vperm.xlu0 %496, %v494
      %v498 = vpop.permute.xlu0 %497
      %v501 = vcombine.high %v491, %v491
      %v503 = vunpack.c.l.s4 1983009808
      %v504 = vunpack.c.0.s8 %v503
      %v505 = vlaneseq
      %v506 = vshrl.u32 %v505, 7
      %v507 = vsub.s32 %v504, %v506
      %v508 = vrot.slane %v491, %v507
      %v510 = vunpack.c.l.s4 1983009808
      %v511 = vunpack.c.0.s8 %v510
      %v512 = vlaneseq
      %v513 = vshrl.u32 %v512, 7
      %v514 = vsub.s32 %v511, %v513
      %v515 = vrot.slane %v501, %v514
      %v516 = vcombine.high %v508, %v508
      %vm517 = vcmask 31744
      %v519 = vsel %vm517, %v493, 0
      %vm521 = vcmask 1041408
      %v523 = vsel %vm521, %v508, 0
      %v526 = vsel %vm521, %v516, 0
      %v529 = vsel %vm521, %v515, 0
      %531 = vmatprep.subr.bf16.mxu0 %v526
      %532 = vmatpush1.bf16.msra.mxu0 %v523
      %533 = vmatprep.subr.bf16.mxu0 0
      %534 = vmatpush1.bf16.msra.mxu0 0
      %535 = vmatprep.subr.bf16.mxu0 0
      %536 = vmatpush1.bf16.msra.mxu0 0
      %537 = vmatprep.subr.bf16.mxu0 0
      %538 = vmatpush1.bf16.msra.mxu0 0
      %539 = vmatprep.subr.bf16.mxu0 0
      %540 = vmatpush1.bf16.msra.mxu0 0
      %541 = vmatprep.subr.bf16.mxu0 0
      %542 = vmatpush1.bf16.msra.mxu0 0
      %543 = vmatprep.subr.bf16.mxu0 0
      %544 = vmatpush1.bf16.msra.mxu0 0
      %545 = vmatprep.subr.bf16.mxu0 0
      %546 = vmatpush1.bf16.msra.mxu0 0
      %547 = vmatprep.subr.bf16.mxu0 0
      %548 = vmatpush1.bf16.msra.mxu0 0
      %549 = vmatprep.subr.bf16.mxu0 0
      %550 = vmatpush1.bf16.msra.mxu0 0
      %551 = vmatprep.subr.bf16.mxu0 0
      %552 = vmatpush1.bf16.msra.mxu0 0
      %553 = vmatprep.subr.bf16.mxu0 0
      %554 = vmatpush1.bf16.msra.mxu0 0
      %555 = vmatprep.subr.bf16.mxu0 0
      %556 = vmatpush1.bf16.msra.mxu0 0
      %557 = vmatprep.subr.bf16.mxu0 0
      %558 = vmatpush1.bf16.msra.mxu0 0
      %559 = vmatprep.subr.bf16.mxu0 0
      %560 = vmatpush1.bf16.msra.mxu0 0
      %561 = vmatprep.subr.bf16.mxu0 0
      %562 = vmatpush1.bf16.msra.mxu0 0
      %563 = vmatprep.mubr.bf16.mxu0 0
      %564 = vmatmul.mubr.bf16.gmra.mrb[0].mxu0 %v519
      %v565 = vpop.f32.mrb[0].mxu0
      %v566 = vadd.f32 %v498, %v565
      %v567 = vpop.f32.mrb[0].mxu0
      %v568 = vadd.f32 %v498, %v567
      %v569 = vpop.f32.mrb[0].mxu0
      %v570 = vpop.f32.mrb[0].mxu0
      %571 = vdwg.mxu0
      %572 = vmatprep.subr.bf16.mxu0 0
      %573 = vmatpush1.bf16.msra.mxu0 %v529
      %574 = vmatprep.subr.bf16.mxu0 0
      %575 = vmatpush1.bf16.msra.mxu0 0
      %576 = vmatprep.subr.bf16.mxu0 0
      %577 = vmatpush1.bf16.msra.mxu0 0
      %578 = vmatprep.subr.bf16.mxu0 0
      %579 = vmatpush1.bf16.msra.mxu0 0
      %580 = vmatprep.subr.bf16.mxu0 0
      %581 = vmatpush1.bf16.msra.mxu0 0
      %582 = vmatprep.subr.bf16.mxu0 0
      %583 = vmatpush1.bf16.msra.mxu0 0
      %584 = vmatprep.subr.bf16.mxu0 0
      %585 = vmatpush1.bf16.msra.mxu0 0
      %586 = vmatprep.subr.bf16.mxu0 0
      %587 = vmatpush1.bf16.msra.mxu0 0
      %588 = vmatprep.subr.bf16.mxu0 0
      %589 = vmatpush1.bf16.msra.mxu0 0
      %590 = vmatprep.subr.bf16.mxu0 0
      %591 = vmatpush1.bf16.msra.mxu0 0
      %592 = vmatprep.subr.bf16.mxu0 0
      %593 = vmatpush1.bf16.msra.mxu0 0
      %594 = vmatprep.subr.bf16.mxu0 0
      %595 = vmatpush1.bf16.msra.mxu0 0
      %596 = vmatprep.subr.bf16.mxu0 0
      %597 = vmatpush1.bf16.msra.mxu0 0
      %598 = vmatprep.subr.bf16.mxu0 0
      %599 = vmatpush1.bf16.msra.mxu0 0
      %600 = vmatprep.subr.bf16.mxu0 0
      %601 = vmatpush1.bf16.msra.mxu0 0
      %602 = vmatprep.subr.bf16.mxu0 0
      %603 = vmatpush1.bf16.msra.mxu0 0
      %604 = vmatprep.mubr.bf16.mxu0 0
      %605 = vmatmul.mubr.bf16.gmra.mrb[0].mxu0 %v519
      %v606 = vpop.f32.mrb[0].mxu0
      %v607 = vadd.f32 %v498, %v606
      %v608 = vpop.f32.mrb[0].mxu0
      %v609 = vpop.f32.mrb[0].mxu0
      %v610 = vpop.f32.mrb[0].mxu0
      %611 = vdwg.mxu0
      %v612 = vld [vmem:[%s4] sm:$0x1]
      %v613 = vld [vmem:[%s5] sm:$0x3]
      %615 = vset.pattern.permute.xlu0 0
      %616 = vperm.xlu0 %615, %v613
      %v617 = vpop.permute.xlu0 %616
      %v620 = vcombine.high %v492, %v492
      %v622 = vunpack.c.l.s4 1983009808
      %v623 = vunpack.c.0.s8 %v622
      %v624 = vlaneseq
      %v625 = vshrl.u32 %v624, 7
      %v626 = vsub.s32 %v623, %v625
      %v627 = vrot.slane %v492, %v626
      %v629 = vunpack.c.l.s4 1983009808
      %v630 = vunpack.c.0.s8 %v629
      %v631 = vlaneseq
      %v632 = vshrl.u32 %v631, 7
      %v633 = vsub.s32 %v630, %v632
      %v634 = vrot.slane %v620, %v633
      %v635 = vcombine.high %v627, %v627
      %v637 = vsel %vm517, %v612, 0
      %v640 = vsel %vm521, %v627, 0
      %v643 = vsel %vm521, %v635, 0
      %v646 = vsel %vm521, %v634, 0
      %648 = vmatprep.subr.bf16.mxu0 %v643
      %649 = vmatpush1.bf16.msra.mxu0 %v640
      %650 = vmatprep.subr.bf16.mxu0 0
      %651 = vmatpush1.bf16.msra.mxu0 0
      %652 = vmatprep.subr.bf16.mxu0 0
      %653 = vmatpush1.bf16.msra.mxu0 0
      %654 = vmatprep.subr.bf16.mxu0 0
      %655 = vmatpush1.bf16.msra.mxu0 0
      %656 = vmatprep.subr.bf16.mxu0 0
      %657 = vmatpush1.bf16.msra.mxu0 0
      %658 = vmatprep.subr.bf16.mxu0 0
      %659 = vmatpush1.bf16.msra.mxu0 0
      %660 = vmatprep.subr.bf16.mxu0 0
      %661 = vmatpush1.bf16.msra.mxu0 0
      %662 = vmatprep.subr.bf16.mxu0 0
      %663 = vmatpush1.bf16.msra.mxu0 0
      %664 = vmatprep.subr.bf16.mxu0 0
      %665 = vmatpush1.bf16.msra.mxu0 0
      %666 = vmatprep.subr.bf16.mxu0 0
      %667 = vmatpush1.bf16.msra.mxu0 0
      %668 = vmatprep.subr.bf16.mxu0 0
      %669 = vmatpush1.bf16.msra.mxu0 0
      %670 = vmatprep.subr.bf16.mxu0 0
      %671 = vmatpush1.bf16.msra.mxu0 0
      %672 = vmatprep.subr.bf16.mxu0 0
      %673 = vmatpush1.bf16.msra.mxu0 0
      %674 = vmatprep.subr.bf16.mxu0 0
      %675 = vmatpush1.bf16.msra.mxu0 0
      %676 = vmatprep.subr.bf16.mxu0 0
      %677 = vmatpush1.bf16.msra.mxu0 0
      %678 = vmatprep.subr.bf16.mxu0 0
      %679 = vmatpush1.bf16.msra.mxu0 0
      %680 = vmatprep.mubr.bf16.mxu0 0
      %681 = vmatmul.mubr.bf16.gmra.mrb[0].mxu0 %v637
      %v682 = vpop.f32.mrb[0].mxu0
      %v683 = vadd.f32 %v617, %v682
      %v684 = vpop.f32.mrb[0].mxu0
      %v685 = vadd.f32 %v617, %v684
      %v686 = vpop.f32.mrb[0].mxu0
      %v687 = vpop.f32.mrb[0].mxu0
      %688 = vdwg.mxu0
      %689 = vmatprep.subr.bf16.mxu0 0
      %690 = vmatpush1.bf16.msra.mxu0 %v646
      %691 = vmatprep.subr.bf16.mxu0 0
      %692 = vmatpush1.bf16.msra.mxu0 0
      %693 = vmatprep.subr.bf16.mxu0 0
      %694 = vmatpush1.bf16.msra.mxu0 0
      %695 = vmatprep.subr.bf16.mxu0 0
      %696 = vmatpush1.bf16.msra.mxu0 0
      %697 = vmatprep.subr.bf16.mxu0 0
      %698 = vmatpush1.bf16.msra.mxu0 0
      %699 = vmatprep.subr.bf16.mxu0 0
      %700 = vmatpush1.bf16.msra.mxu0 0
      %701 = vmatprep.subr.bf16.mxu0 0
      %702 = vmatpush1.bf16.msra.mxu0 0
      %703 = vmatprep.subr.bf16.mxu0 0
      %704 = vmatpush1.bf16.msra.mxu0 0
      %705 = vmatprep.subr.bf16.mxu0 0
      %706 = vmatpush1.bf16.msra.mxu0 0
      %707 = vmatprep.subr.bf16.mxu0 0
      %708 = vmatpush1.bf16.msra.mxu0 0
      %709 = vmatprep.subr.bf16.mxu0 0
      %710 = vmatpush1.bf16.msra.mxu0 0
      %711 = vmatprep.subr.bf16.mxu0 0
      %712 = vmatpush1.bf16.msra.mxu0 0
      %713 = vmatprep.subr.bf16.mxu0 0
      %714 = vmatpush1.bf16.msra.mxu0 0
      %715 = vmatprep.subr.bf16.mxu0 0
      %716 = vmatpush1.bf16.msra.mxu0 0
      %717 = vmatprep.subr.bf16.mxu0 0
      %718 = vmatpush1.bf16.msra.mxu0 0
      %719 = vmatprep.subr.bf16.mxu0 0
      %720 = vmatpush1.bf16.msra.mxu0 0
      %721 = vmatprep.mubr.bf16.mxu0 0
      %722 = vmatmul.mubr.bf16.gmra.mrb[0].mxu0 %v637
      %v723 = vpop.f32.mrb[0].mxu0
      %v724 = vadd.f32 %v617, %v723
      %v725 = vpop.f32.mrb[0].mxu0
      %v726 = vpop.f32.mrb[0].mxu0
      %v727 = vpop.f32.mrb[0].mxu0
      %728 = vdwg.mxu0
      %v729 = vadd.f32 %v566, %v683
      %v730 = vadd.f32 %v568, %v685
      %v731 = vadd.f32 %v607, %v724
      %v732 = vmax.f32 %v729, 0.0
      %v733 = vmax.f32 %v730, 0.0
      %v734 = vmax.f32 %v731, 0.0
      %v735 = vld [vmem:[%s6] sm:$0x3]
      %737 = vset.pattern.permute.xlu0 0
      %738 = vperm.xlu0 %737, %v735
      %v739 = vpop.permute.xlu0 %738
      %v741 = vmul.f32 %v732, %v739
      %v742 = vmul.f32 %v733, %v739
      %v743 = vmul.f32 %v734, %v739
      %v744 = vsel %vm521, %v741, 0.0
      %v745 = vrot.slane %v744, 4
      %v746 = vadd.f32 %v744, %v745
      %v747 = vrot.slane %v746, 2
      %v748 = vadd.f32 %v746, %v747
      %v749 = vrot.slane %v748, 1
      %v750 = vadd.f32 %v748, %v749
      %v751 = vsel %vm521, %v742, 0.0
      %v752 = vrot.slane %v751, 4
      %v753 = vadd.f32 %v751, %v752
      %v754 = vrot.slane %v753, 2
      %v755 = vadd.f32 %v753, %v754
      %v756 = vrot.slane %v755, 1
      %v757 = vadd.f32 %v755, %v756
      %vm758 = vcmask 549888
      %v759 = vsel %vm758, %v743, 0.0
      %v760 = vrot.slane %v759, 4
      %v761 = vadd.f32 %v759, %v760
      %v762 = vrot.slane %v761, 2
      %v763 = vadd.f32 %v761, %v762
      %v764 = vrot.slane %v763, 1
      %v765 = vadd.f32 %v763, %v764
      %v766 = vld [vmem:[#allocation2] sm:$0x1]
      %768 = vset.pattern.permute.xlu0 0
      %769 = vperm.xlu0 %768, %v766
      %v770 = vpop.permute.xlu0 %769
      %v772 = vlaneseq
      %v773 = vshrl.u32 %v772, 7
      %v774 = vsub.s32 0, %v773
      %v775 = vrot.slane %v770, %v774
      %v776 = vadd.f32 %v750, %v775
      %v777 = vadd.f32 %v757, %v775
      %v778 = vadd.f32 %v765, %v775
      %v779 = vxor.u32 %v776, 2147483648
      %v780 = vxor.u32 %v777, 2147483648
      %v781 = vxor.u32 %v778, 2147483648
      %v782 = vmul.f32 %v779, 1.442695
      %v783 = vpow.pop %v782
      %v784 = vmul.f32 %v780, 1.442695
      %v785 = vpow.pop %v784
      %v786 = vmul.f32 %v781, 1.442695
      %v787 = vpow.pop %v786
      %v788 = vadd.f32 %v783, 1.0
      %v789 = vadd.f32 %v785, 1.0
      %v790 = vadd.f32 %v787, 1.0
      %v791 = vrcp.pop %v788
      %v792 = vmul.f32 1.0, %v791
      %v793 = vrcp.pop %v789
      %v794 = vmul.f32 1.0, %v793
      %v795 = vrcp.pop %v790
      %v796 = vmul.f32 1.0, %v795
      %v797 = vunpack.c.l.bf16 %v492
      %v798 = vunpack.c.h.bf16 %v492
      %v801 = vcombine.low %v792, %v794
      %v803 = vmul.f32 %v797, %v801
      %v804 = vmul.f32 %v798, %v796
      %v806 = vcombine.high %v803, %v803
      %v808 = vpack.c.bf16 %v803, %v803
      %v809 = vpack.c.bf16 %v806, %v806
      %v810 = vpack.c.bf16 %v804, %v804
      %v811 = vcombine.low %v491, %v491
      %v813 = vunpack.c.l.s4 1983009808
      %v814 = vunpack.c.0.s8 %v813
      %v815 = vlaneseq
      %v816 = vshrl.u32 %v815, 7
      %v817 = vsub.s32 %v814, %v816
      %v818 = vrot.slane %v811, %v817
      %v819 = vcombine.high %v818, %v818
      %v822 = vsel %vm521, %v808, %v818
      %v825 = vsel %vm521, %v809, %v819
      %v827 = vsel %vm521, %v810, %v508
      %v828 = vlaneseq
      %v829 = vand.u32 %v828, 127
      %v830 = vadd.s32 %v829, 128
      %v831 = vadd.s32 %v829, 256
      %v832 = vadd.s32 %v829, 1
      %v833 = vadd.s32 %v830, 1
      %v834 = vadd.s32 %v831, 1
      %vm835 = vcmp.lt.s32.totalorder %v832, 0
      %v836 = vsub.s32 0, %v832
      %v837 = vsel %vm835, %v836, %v832
      %v838 = vmul.u32.u64.compose %v837, 3817748708
      %v839 = vextract.low.u32 %v838
      %v840 = vextract.high.u32 %v838
      %v841 = vshrl.u32 %v840, 4
      %v842 = vmul.u32 %v841, 18
      %v843 = vsub.s32 %v837, %v842
      %v844 = vsub.s32 0, %v843
      %v845 = vsel %vm835, %v844, %v843
      %vm846 = vcmp.lt.s32.totalorder %v833, 0
      %v847 = vsub.s32 0, %v833
      %v848 = vsel %vm846, %v847, %v833
      %v849 = vmul.u32.u64.compose %v848, 3817748708
      %v850 = vextract.low.u32 %v849
      %v851 = vextract.high.u32 %v849
      %v852 = vshrl.u32 %v851, 4
      %v853 = vmul.u32 %v852, 18
      %v854 = vsub.s32 %v848, %v853
      %v855 = vsub.s32 0, %v854
      %v856 = vsel %vm846, %v855, %v854
      %vm857 = vcmp.lt.s32.totalorder %v834, 0
      %v858 = vsub.s32 0, %v834
      %v859 = vsel %vm857, %v858, %v834
      %v860 = vmul.u32.u64.compose %v859, 3817748708
      %v861 = vextract.low.u32 %v860
      %v862 = vextract.high.u32 %v860
      %v863 = vshrl.u32 %v862, 4
      %v864 = vmul.u32 %v863, 18
      %v865 = vsub.s32 %v859, %v864
      %v866 = vsub.s32 0, %v865
      %v867 = vsel %vm857, %v866, %v865
      %vm868 = vcmp.ne.s32.totalorder %v845, 0
      %vm869 = vcmp.ne.s32.totalorder %v856, 0
      %vm870 = vcmp.ne.s32.totalorder %v867, 0
      %vm871 = vcmp.lt.s32.totalorder %v845, 0
      %vm872 = vcmp.lt.s32.totalorder %v856, 0
      %vm873 = vcmp.lt.s32.totalorder %v867, 0
      %vm874 = vmand %vm871, %vm868
      %vm875 = vmand %vm872, %vm869
      %vm876 = vmand %vm873, %vm870
      %v877 = vadd.s32 %v845, 18
      %v878 = vadd.s32 %v856, 18
      %v879 = vadd.s32 %v867, 18
      %v880 = vsel %vm874, %v877, %v845
      %v881 = vsel %vm875, %v878, %v856
      %v882 = vsel %vm876, %v879, %v867
      %vm883 = vcmp.ge.s32.totalorder %v880, 1
      %vm884 = vcmp.ge.s32.totalorder %v881, 1
      %vm885 = vcmp.ge.s32.totalorder %v882, 1
      %vm886 = vcmp.le.s32.totalorder %v880, 16
      %vm887 = vcmp.le.s32.totalorder %v881, 16
      %vm888 = vcmp.le.s32.totalorder %v882, 16
      %vm889 = vmand %vm883, %vm886
      %vm890 = vmand %vm884, %vm887
      %vm891 = vmand %vm885, %vm888
      %v892 = vsel %vm889, 1, 0
      %v893 = vsel %vm890, 1, 0
      %v894 = vsel %vm891, 1, 0
      %v895 = vcvt.s32.f32 %v892
      %v896 = vcvt.s32.f32 %v893
      %v897 = vcvt.s32.f32 %v894
      %v901 = vrot.slane %v822, 4
      %v902 = vrot.slane %v825, 4
      %v903 = vrot.slane %v827, 4
      %904 = vrot.lane.b32.xlu0 %v901, 127
      %v905 = vpop.permute.xlu0 %904
      %906 = vrot.lane.b32.xlu0 %v902, 127
      %v907 = vpop.permute.xlu0 %906
      %908 = vrot.lane.b32.xlu0 %v903, 127
      %v909 = vpop.permute.xlu0 %908
      %vm910 = vcmask 1039360
      %v911 = vsel %vm910, %v905, %v907
      %v912 = vsel %vm910, %v907, %v909
      %913 = vrot.lane.b32.xlu0 %v822, 126
      %v914 = vpop.permute.xlu0 %913
      %915 = vrot.lane.b32.xlu0 %v825, 126
      %v916 = vpop.permute.xlu0 %915
      %917 = vrot.lane.b32.xlu0 %v827, 126
      %v918 = vpop.permute.xlu0 %917
      %vm919 = vcmask 1031168
      %v920 = vsel %vm919, %v914, %v916
      %v921 = vsel %vm919, %v916, %v918
      %922 = vrot.lane.b32.xlu0 %v901, 110
      %v923 = vpop.permute.xlu0 %922
      %924 = vrot.lane.b32.xlu0 %v902, 110
      %v925 = vpop.permute.xlu0 %924
      %926 = vrot.lane.b32.xlu0 %v903, 110
      %v927 = vpop.permute.xlu0 %926
      %vm928 = vcmask 900096
      %v929 = vsel %vm928, %v923, %v925
      %v930 = vsel %vm928, %v925, %v927
      %931 = vrot.lane.b32.xlu0 %v822, 109
      %v932 = vpop.permute.xlu0 %931
      %933 = vrot.lane.b32.xlu0 %v825, 109
      %v934 = vpop.permute.xlu0 %933
      %935 = vrot.lane.b32.xlu0 %v827, 109
      %v936 = vpop.permute.xlu0 %935
      %vm937 = vcmask 891904
      %v938 = vsel %vm937, %v932, %v934
      %v939 = vsel %vm937, %v934, %v936
      %940 = vrot.lane.b32.xlu0 %v901, 108
      %v941 = vpop.permute.xlu0 %940
      %942 = vrot.lane.b32.xlu0 %v902, 108
      %v943 = vpop.permute.xlu0 %942
      %944 = vrot.lane.b32.xlu0 %v903, 108
      %v945 = vpop.permute.xlu0 %944
      %vm946 = vcmask 883712
      %v947 = vsel %vm946, %v941, %v943
      %v948 = vsel %vm946, %v943, %v945
      %949 = vrot.lane.b32.xlu0 %v822, 92
      %v950 = vpop.permute.xlu0 %949
      %951 = vrot.lane.b32.xlu0 %v825, 92
      %v952 = vpop.permute.xlu0 %951
      %953 = vrot.lane.b32.xlu0 %v827, 92
      %v954 = vpop.permute.xlu0 %953
      %vm955 = vcmask 752640
      %v956 = vsel %vm955, %v950, %v952
      %v957 = vsel %vm955, %v952, %v954
      %958 = vrot.lane.b32.xlu0 %v901, 91
      %v959 = vpop.permute.xlu0 %958
      %960 = vrot.lane.b32.xlu0 %v902, 91
      %v961 = vpop.permute.xlu0 %960
      %962 = vrot.lane.b32.xlu0 %v903, 91
      %v963 = vpop.permute.xlu0 %962
      %vm964 = vcmask 744448
      %v965 = vsel %vm964, %v959, %v961
      %v966 = vsel %vm964, %v961, %v963
      %967 = vrot.lane.b32.xlu0 %v822, 90
      %v968 = vpop.permute.xlu0 %967
      %969 = vrot.lane.b32.xlu0 %v825, 90
      %v970 = vpop.permute.xlu0 %969
      %971 = vrot.lane.b32.xlu0 %v827, 90
      %v972 = vpop.permute.xlu0 %971
      %vm973 = vcmask 736256
      %v974 = vsel %vm973, %v968, %v970
      %v975 = vsel %vm973, %v970, %v972
      %vm976 = vcmask 1043456
      %v978 = vsel %vm976, %v822, %v911
      %v981 = vsel %vm976, %v825, %v912
      %v984 = vsel %vm976, %v827, %v909
      %v988 = vsel %vm976, %v920, %v929
      %v992 = vsel %vm976, %v921, %v930
      %v996 = vsel %vm976, %v918, %v927
      %v1000 = vsel %vm976, %v938, %v947
      %v1004 = vsel %vm976, %v939, %v948
      %v1008 = vsel %vm976, %v936, %v945
      %v1012 = vsel %vm976, %v956, %v965
      %v1016 = vsel %vm976, %v957, %v966
      %v1020 = vsel %vm976, %v954, %v963
      %v1022 = vld [vmem:[%s8] sm:$0x3]
      %v1023 = vld [vmem:[%s9] sm:$0xf]
      %1025 = vset.pattern.permute.xlu0 0
      %1026 = vperm.xlu0 %1025, %v1023
      %v1027 = vpop.permute.xlu0 %1026
      %vm1029 = vcmask 588800
      %v1031 = vsel %vm1029, %v1022, 0
      %v1034 = vsel %vm976, %v974, 0
      %v1037 = vsel %vm976, %v975, 0
      %v1040 = vsel %vm976, %v972, 0
      %1042 = vmatprep.subr.bf16.mxu0 %v981
      %1043 = vmatpush1.bf16.msra.mxu0 %v978
      %1044 = vmatprep.subr.bf16.mxu0 %v992
      %1045 = vmatpush1.bf16.msra.mxu0 %v988
      %1046 = vmatprep.subr.bf16.mxu0 %v1004
      %1047 = vmatpush1.bf16.msra.mxu0 %v1000
      %1048 = vmatprep.subr.bf16.mxu0 %v1016
      %1049 = vmatpush1.bf16.msra.mxu0 %v1012
      %1050 = vmatprep.subr.bf16.mxu0 %v1037
      %1051 = vmatpush1.bf16.msra.mxu0 %v1034
      %1052 = vmatprep.subr.bf16.mxu0 0
      %1053 = vmatpush1.bf16.msra.mxu0 0
      %1054 = vmatprep.subr.bf16.mxu0 0
      %1055 = vmatpush1.bf16.msra.mxu0 0
      %1056 = vmatprep.subr.bf16.mxu0 0
      %1057 = vmatpush1.bf16.msra.mxu0 0
      %1058 = vmatprep.subr.bf16.mxu0 0
      %1059 = vmatpush1.bf16.msra.mxu0 0
      %1060 = vmatprep.subr.bf16.mxu0 0
      %1061 = vmatpush1.bf16.msra.mxu0 0
      %1062 = vmatprep.subr.bf16.mxu0 0
      %1063 = vmatpush1.bf16.msra.mxu0 0
      %1064 = vmatprep.subr.bf16.mxu0 0
      %1065 = vmatpush1.bf16.msra.mxu0 0
      %1066 = vmatprep.subr.bf16.mxu0 0
      %1067 = vmatpush1.bf16.msra.mxu0 0
      %1068 = vmatprep.subr.bf16.mxu0 0
      %1069 = vmatpush1.bf16.msra.mxu0 0
      %1070 = vmatprep.subr.bf16.mxu0 0
      %1071 = vmatpush1.bf16.msra.mxu0 0
      %1072 = vmatprep.subr.bf16.mxu0 0
      %1073 = vmatpush1.bf16.msra.mxu0 0
      %1074 = vmatprep.mubr.bf16.mxu0 0
      %1075 = vmatmul.mubr.bf16.gmra.mrb[0].mxu0 %v1031
      %v1076 = vpop.f32.mrb[0].mxu0
      %v1077 = vadd.f32 %v1027, %v1076
      %v1078 = vpop.f32.mrb[0].mxu0
      %v1079 = vadd.f32 %v1027, %v1078
      %v1080 = vpop.f32.mrb[0].mxu0
      %v1081 = vpop.f32.mrb[0].mxu0
      %1082 = vdwg.mxu0
      %1083 = vmatprep.subr.bf16.mxu0 0
      %1084 = vmatpush1.bf16.msra.mxu0 %v984
      %1085 = vmatprep.subr.bf16.mxu0 0
      %1086 = vmatpush1.bf16.msra.mxu0 %v996
      %1087 = vmatprep.subr.bf16.mxu0 0
      %1088 = vmatpush1.bf16.msra.mxu0 %v1008
      %1089 = vmatprep.subr.bf16.mxu0 0
      %1090 = vmatpush1.bf16.msra.mxu0 %v1020
      %1091 = vmatprep.subr.bf16.mxu0 0
      %1092 = vmatpush1.bf16.msra.mxu0 %v1040
      %1093 = vmatprep.subr.bf16.mxu0 0
      %1094 = vmatpush1.bf16.msra.mxu0 0
      %1095 = vmatprep.subr.bf16.mxu0 0
      %1096 = vmatpush1.bf16.msra.mxu0 0
      %1097 = vmatprep.subr.bf16.mxu0 0
      %1098 = vmatpush1.bf16.msra.mxu0 0
      %1099 = vmatprep.subr.bf16.mxu0 0
      %1100 = vmatpush1.bf16.msra.mxu0 0
      %1101 = vmatprep.subr.bf16.mxu0 0
      %1102 = vmatpush1.bf16.msra.mxu0 0
      %1103 = vmatprep.subr.bf16.mxu0 0
      %1104 = vmatpush1.bf16.msra.mxu0 0
      %1105 = vmatprep.subr.bf16.mxu0 0
      %1106 = vmatpush1.bf16.msra.mxu0 0
      %1107 = vmatprep.subr.bf16.mxu0 0
      %1108 = vmatpush1.bf16.msra.mxu0 0
      %1109 = vmatprep.subr.bf16.mxu0 0
      %1110 = vmatpush1.bf16.msra.mxu0 0
      %1111 = vmatprep.subr.bf16.mxu0 0
      %1112 = vmatpush1.bf16.msra.mxu0 0
      %1113 = vmatprep.subr.bf16.mxu0 0
      %1114 = vmatpush1.bf16.msra.mxu0 0
      %1115 = vmatprep.mubr.bf16.mxu0 0
      %1116 = vmatmul.mubr.bf16.gmra.mrb[0].mxu0 %v1031
      %v1117 = vpop.f32.mrb[0].mxu0
      %v1118 = vadd.f32 %v1027, %v1117
      %v1119 = vpop.f32.mrb[0].mxu0
      %v1120 = vpop.f32.mrb[0].mxu0
      %v1121 = vpop.f32.mrb[0].mxu0
      %1122 = vdwg.mxu0
      %v1123 = vmax.f32 %v1077, 0.0
      %v1124 = vmax.f32 %v1079, 0.0
      %v1125 = vmax.f32 %v1118, 0.0
      %v1126 = vmul.f32 %v1123, %v895
      %v1127 = vmul.f32 %v1124, %v896
      %v1128 = vmul.f32 %v1125, %v897
      %v1129 = vpack.c.bf16 %v1126, %v1126
      %v1130 = vpack.c.bf16 %v1127, %v1127
      %v1131 = vpack.c.bf16 %v1128, %v1128
      %1135 = vrot.lane.b32.xlu0 %v1129, 19
      %v1136 = vpop.permute.xlu0 %1135
      %1137 = vrot.lane.b32.xlu0 %v1130, 19
      %v1138 = vpop.permute.xlu0 %1137
      %1139 = vrot.lane.b32.xlu0 %v1131, 19
      %v1140 = vpop.permute.xlu0 %1139
      %vm1141 = vcmask 154624
      %v1142 = vsel %vm1141, %v1136, %v1138
      %v1143 = vsel %vm1141, %v1138, %v1140
      %vm1144 = vcmask 154624
      %v1147 = vsel %vm1144, 0, %v1136
      %vm1148 = vcmask 400384
      %v1150 = vsel %vm1148, %v1143, 0
      %v1153 = vrot.slane %v1147, 6
      %v1154 = vrot.slane %v1142, 6
      %v1155 = vrot.slane %v1150, 6
      %1156 = vrot.lane.b32.xlu0 %v1153, 127
      %v1157 = vpop.permute.xlu0 %1156
      %1158 = vrot.lane.b32.xlu0 %v1154, 127
      %v1159 = vpop.permute.xlu0 %1158
      %1160 = vrot.lane.b32.xlu0 %v1155, 127
      %v1161 = vpop.permute.xlu0 %1160
      %v1162 = vsel %vm910, %v1157, %v1159
      %v1163 = vsel %vm910, %v1159, %v1161
      %v1164 = vrot.slane %v1147, 4
      %v1165 = vrot.slane %v1142, 4
      %v1166 = vrot.slane %v1150, 4
      %1167 = vrot.lane.b32.xlu0 %v1164, 126
      %v1168 = vpop.permute.xlu0 %1167
      %1169 = vrot.lane.b32.xlu0 %v1165, 126
      %v1170 = vpop.permute.xlu0 %1169
      %1171 = vrot.lane.b32.xlu0 %v1166, 126
      %v1172 = vpop.permute.xlu0 %1171
      %v1173 = vsel %vm919, %v1168, %v1170
      %v1174 = vsel %vm919, %v1170, %v1172
      %v1175 = vrot.slane %v1147, 2
      %v1176 = vrot.slane %v1142, 2
      %v1177 = vrot.slane %v1150, 2
      %1178 = vrot.lane.b32.xlu0 %v1175, 110
      %v1179 = vpop.permute.xlu0 %1178
      %1180 = vrot.lane.b32.xlu0 %v1176, 110
      %v1181 = vpop.permute.xlu0 %1180
      %1182 = vrot.lane.b32.xlu0 %v1177, 110
      %v1183 = vpop.permute.xlu0 %1182
      %v1184 = vsel %vm928, %v1179, %v1181
      %v1185 = vsel %vm928, %v1181, %v1183
      %1186 = vrot.lane.b32.xlu0 %v1147, 109
      %v1187 = vpop.permute.xlu0 %1186
      %1188 = vrot.lane.b32.xlu0 %v1142, 109
      %v1189 = vpop.permute.xlu0 %1188
      %1190 = vrot.lane.b32.xlu0 %v1150, 109
      %v1191 = vpop.permute.xlu0 %1190
      %v1192 = vsel %vm937, %v1187, %v1189
      %v1193 = vsel %vm937, %v1189, %v1191
      %1194 = vrot.lane.b32.xlu0 %v1153, 108
      %v1195 = vpop.permute.xlu0 %1194
      %1196 = vrot.lane.b32.xlu0 %v1154, 108
      %v1197 = vpop.permute.xlu0 %1196
      %1198 = vrot.lane.b32.xlu0 %v1155, 108
      %v1199 = vpop.permute.xlu0 %1198
      %v1200 = vsel %vm946, %v1195, %v1197
      %v1201 = vsel %vm946, %v1197, %v1199
      %1202 = vrot.lane.b32.xlu0 %v1164, 92
      %v1203 = vpop.permute.xlu0 %1202
      %1204 = vrot.lane.b32.xlu0 %v1165, 92
      %v1205 = vpop.permute.xlu0 %1204
      %1206 = vrot.lane.b32.xlu0 %v1166, 92
      %v1207 = vpop.permute.xlu0 %1206
      %v1208 = vsel %vm955, %v1203, %v1205
      %v1209 = vsel %vm955, %v1205, %v1207
      %1210 = vrot.lane.b32.xlu0 %v1175, 91
      %v1211 = vpop.permute.xlu0 %1210
      %1212 = vrot.lane.b32.xlu0 %v1176, 91
      %v1213 = vpop.permute.xlu0 %1212
      %1214 = vrot.lane.b32.xlu0 %v1177, 91
      %v1215 = vpop.permute.xlu0 %1214
      %v1216 = vsel %vm964, %v1211, %v1213
      %v1217 = vsel %vm964, %v1213, %v1215
      %1218 = vrot.lane.b32.xlu0 %v1147, 90
      %v1219 = vpop.permute.xlu0 %1218
      %1220 = vrot.lane.b32.xlu0 %v1142, 90
      %v1221 = vpop.permute.xlu0 %1220
      %1222 = vrot.lane.b32.xlu0 %v1150, 90
      %v1223 = vpop.permute.xlu0 %1222
      %v1224 = vsel %vm973, %v1219, %v1221
      %v1225 = vsel %vm973, %v1221, %v1223
      %v1227 = vsel %vm521, %v1147, %v1162
      %v1230 = vsel %vm521, %v1142, %v1163
      %v1232 = vsel %vm521, %v1150, %v1161
      %v1234 = vsel %vm976, %v1227, %v1173
      %v1236 = vsel %vm976, %v1230, %v1174
      %v1238 = vsel %vm976, %v1232, %v1172
      %vm1239 = vcmask 1045504
      %v1241 = vsel %vm1239, %v1234, %v1184
      %v1244 = vsel %vm1239, %v1236, %v1185
      %v1247 = vsel %vm1239, %v1238, %v1183
      %v1251 = vsel %vm521, %v1192, %v1200
      %v1254 = vsel %vm521, %v1193, %v1201
      %v1257 = vsel %vm521, %v1191, %v1199
      %v1259 = vsel %vm976, %v1251, %v1208
      %v1261 = vsel %vm976, %v1254, %v1209
      %v1263 = vsel %vm976, %v1257, %v1207
      %v1265 = vsel %vm1239, %v1259, %v1216
      %v1268 = vsel %vm1239, %v1261, %v1217
      %v1271 = vsel %vm1239, %v1263, %v1215
      %v1273 = vld [vmem:[%s10] sm:$0x3]
      %v1274 = vld [vmem:[%s11] sm:$0xf]
      %1276 = vset.pattern.permute.xlu0 0
      %1277 = vperm.xlu0 %1276, %v1274
      %v1278 = vpop.permute.xlu0 %1277
      %vm1280 = vcmask 293888
      %v1282 = vsel %vm1280, %v1273, 0
      %v1285 = vsel %vm521, %v1224, 0
      %v1288 = vsel %vm521, %v1225, 0
      %v1291 = vsel %vm521, %v1223, 0
      %1293 = vmatprep.subr.bf16.mxu0 %v1244
      %1294 = vmatpush1.bf16.msra.mxu0 %v1241
      %1295 = vmatprep.subr.bf16.mxu0 %v1268
      %1296 = vmatpush1.bf16.msra.mxu0 %v1265
      %1297 = vmatprep.subr.bf16.mxu0 %v1288
      %1298 = vmatpush1.bf16.msra.mxu0 %v1285
      %1299 = vmatprep.subr.bf16.mxu0 0
      %1300 = vmatpush1.bf16.msra.mxu0 0
      %1301 = vmatprep.subr.bf16.mxu0 0
      %1302 = vmatpush1.bf16.msra.mxu0 0
      %1303 = vmatprep.subr.bf16.mxu0 0
      %1304 = vmatpush1.bf16.msra.mxu0 0
      %1305 = vmatprep.subr.bf16.mxu0 0
      %1306 = vmatpush1.bf16.msra.mxu0 0
      %1307 = vmatprep.subr.bf16.mxu0 0
      %1308 = vmatpush1.bf16.msra.mxu0 0
      %1309 = vmatprep.subr.bf16.mxu0 0
      %1310 = vmatpush1.bf16.msra.mxu0 0
      %1311 = vmatprep.subr.bf16.mxu0 0
      %1312 = vmatpush1.bf16.msra.mxu0 0
      %1313 = vmatprep.subr.bf16.mxu0 0
      %1314 = vmatpush1.bf16.msra.mxu0 0
      %1315 = vmatprep.subr.bf16.mxu0 0
      %1316 = vmatpush1.bf16.msra.mxu0 0
      %1317 = vmatprep.subr.bf16.mxu0 0
      %1318 = vmatpush1.bf16.msra.mxu0 0
      %1319 = vmatprep.subr.bf16.mxu0 0
      %1320 = vmatpush1.bf16.msra.mxu0 0
      %1321 = vmatprep.subr.bf16.mxu0 0
      %1322 = vmatpush1.bf16.msra.mxu0 0
      %1323 = vmatprep.subr.bf16.mxu0 0
      %1324 = vmatpush1.bf16.msra.mxu0 0
      %1325 = vmatprep.mubr.bf16.mxu0 0
      %1326 = vmatmul.mubr.bf16.gmra.mrb[0].mxu0 %v1282
      %v1327 = vpop.f32.mrb[0].mxu0
      %v1328 = vadd.f32 %v1278, %v1327
      %v1329 = vpop.f32.mrb[0].mxu0
      %v1330 = vadd.f32 %v1278, %v1329
      %v1331 = vpop.f32.mrb[0].mxu0
      %v1332 = vpop.f32.mrb[0].mxu0
      %1333 = vdwg.mxu0
      %1334 = vmatprep.subr.bf16.mxu0 0
      %1335 = vmatpush1.bf16.msra.mxu0 %v1247
      %1336 = vmatprep.subr.bf16.mxu0 0
      %1337 = vmatpush1.bf16.msra.mxu0 %v1271
      %1338 = vmatprep.subr.bf16.mxu0 0
      %1339 = vmatpush1.bf16.msra.mxu0 %v1291
      %1340 = vmatprep.subr.bf16.mxu0 0
      %1341 = vmatpush1.bf16.msra.mxu0 0
      %1342 = vmatprep.subr.bf16.mxu0 0
      %1343 = vmatpush1.bf16.msra.mxu0 0
      %1344 = vmatprep.subr.bf16.mxu0 0
      %1345 = vmatpush1.bf16.msra.mxu0 0
      %1346 = vmatprep.subr.bf16.mxu0 0
      %1347 = vmatpush1.bf16.msra.mxu0 0
      %1348 = vmatprep.subr.bf16.mxu0 0
      %1349 = vmatpush1.bf16.msra.mxu0 0
      %1350 = vmatprep.subr.bf16.mxu0 0
      %1351 = vmatpush1.bf16.msra.mxu0 0
      %1352 = vmatprep.subr.bf16.mxu0 0
      %1353 = vmatpush1.bf16.msra.mxu0 0
      %1354 = vmatprep.subr.bf16.mxu0 0
      %1355 = vmatpush1.bf16.msra.mxu0 0
      %1356 = vmatprep.subr.bf16.mxu0 0
      %1357 = vmatpush1.bf16.msra.mxu0 0
      %1358 = vmatprep.subr.bf16.mxu0 0
      %1359 = vmatpush1.bf16.msra.mxu0 0
      %1360 = vmatprep.subr.bf16.mxu0 0
      %1361 = vmatpush1.bf16.msra.mxu0 0
      %1362 = vmatprep.subr.bf16.mxu0 0
      %1363 = vmatpush1.bf16.msra.mxu0 0
      %1364 = vmatprep.subr.bf16.mxu0 0
      %1365 = vmatpush1.bf16.msra.mxu0 0
      %1366 = vmatprep.mubr.bf16.mxu0 0
      %1367 = vmatmul.mubr.bf16.gmra.mrb[0].mxu0 %v1282
      %v1368 = vpop.f32.mrb[0].mxu0
      %v1369 = vadd.f32 %v1278, %v1368
      %v1370 = vpop.f32.mrb[0].mxu0
      %v1371 = vpop.f32.mrb[0].mxu0
      %v1372 = vpop.f32.mrb[0].mxu0
      %1373 = vdwg.mxu0
      %v1374 = vld [vmem:[%s12] sm:$0x3]
      %v1375 = vld [vmem:[%s13] sm:$0xf]
      %1377 = vset.pattern.permute.xlu0 0
      %1378 = vperm.xlu0 %1377, %v1375
      %v1379 = vpop.permute.xlu0 %1378
      %vm1381 = vcmask 64512
      %v1383 = vsel %vm1381, %v1374, 0
      %v1385 = vsel %vm976, %v938, 0
      %v1387 = vsel %vm976, %v939, 0
      %v1389 = vsel %vm976, %v936, 0
      %1391 = vmatprep.subr.bf16.mxu0 %v1387
      %1392 = vmatpush1.bf16.msra.mxu0 %v1385
      %1393 = vmatprep.subr.bf16.mxu0 0
      %1394 = vmatpush1.bf16.msra.mxu0 0
      %1395 = vmatprep.subr.bf16.mxu0 0
      %1396 = vmatpush1.bf16.msra.mxu0 0
      %1397 = vmatprep.subr.bf16.mxu0 0
      %1398 = vmatpush1.bf16.msra.mxu0 0
      %1399 = vmatprep.subr.bf16.mxu0 0
      %1400 = vmatpush1.bf16.msra.mxu0 0
      %1401 = vmatprep.subr.bf16.mxu0 0
      %1402 = vmatpush1.bf16.msra.mxu0 0
      %1403 = vmatprep.subr.bf16.mxu0 0
      %1404 = vmatpush1.bf16.msra.mxu0 0
      %1405 = vmatprep.subr.bf16.mxu0 0
      %1406 = vmatpush1.bf16.msra.mxu0 0
      %1407 = vmatprep.subr.bf16.mxu0 0
      %1408 = vmatpush1.bf16.msra.mxu0 0
      %1409 = vmatprep.subr.bf16.mxu0 0
      %1410 = vmatpush1.bf16.msra.mxu0 0
      %1411 = vmatprep.subr.bf16.mxu0 0
      %1412 = vmatpush1.bf16.msra.mxu0 0
      %1413 = vmatprep.subr.bf16.mxu0 0
      %1414 = vmatpush1.bf16.msra.mxu0 0
      %1415 = vmatprep.subr.bf16.mxu0 0
      %1416 = vmatpush1.bf16.msra.mxu0 0
      %1417 = vmatprep.subr.bf16.mxu0 0
      %1418 = vmatpush1.bf16.msra.mxu0 0
      %1419 = vmatprep.subr.bf16.mxu0 0
      %1420 = vmatpush1.bf16.msra.mxu0 0
      %1421 = vmatprep.subr.bf16.mxu0 0
      %1422 = vmatpush1.bf16.msra.mxu0 0
      %1423 = vmatprep.mubr.bf16.mxu0 0
      %1424 = vmatmul.mubr.bf16.gmra.mrb[0].mxu0 %v1383
      %v1425 = vpop.f32.mrb[0].mxu0
      %v1426 = vadd.f32 %v1379, %v1425
      %v1427 = vpop.f32.mrb[0].mxu0
      %v1428 = vadd.f32 %v1379, %v1427
      %v1429 = vpop.f32.mrb[0].mxu0
      %v1430 = vpop.f32.mrb[0].mxu0
      %1431 = vdwg.mxu0
      %1432 = vmatprep.subr.bf16.mxu0 0
      %1433 = vmatpush1.bf16.msra.mxu0 %v1389
      %1434 = vmatprep.subr.bf16.mxu0 0
      %1435 = vmatpush1.bf16.msra.mxu0 0
      %1436 = vmatprep.subr.bf16.mxu0 0
      %1437 = vmatpush1.bf16.msra.mxu0 0
      %1438 = vmatprep.subr.bf16.mxu0 0
      %1439 = vmatpush1.bf16.msra.mxu0 0
      %1440 = vmatprep.subr.bf16.mxu0 0
      %1441 = vmatpush1.bf16.msra.mxu0 0
      %1442 = vmatprep.subr.bf16.mxu0 0
      %1443 = vmatpush1.bf16.msra.mxu0 0
      %1444 = vmatprep.subr.bf16.mxu0 0
      %1445 = vmatpush1.bf16.msra.mxu0 0
      %1446 = vmatprep.subr.bf16.mxu0 0
      %1447 = vmatpush1.bf16.msra.mxu0 0
      %1448 = vmatprep.subr.bf16.mxu0 0
      %1449 = vmatpush1.bf16.msra.mxu0 0
      %1450 = vmatprep.subr.bf16.mxu0 0
      %1451 = vmatpush1.bf16.msra.mxu0 0
      %1452 = vmatprep.subr.bf16.mxu0 0
      %1453 = vmatpush1.bf16.msra.mxu0 0
      %1454 = vmatprep.subr.bf16.mxu0 0
      %1455 = vmatpush1.bf16.msra.mxu0 0
      %1456 = vmatprep.subr.bf16.mxu0 0
      %1457 = vmatpush1.bf16.msra.mxu0 0
      %1458 = vmatprep.subr.bf16.mxu0 0
      %1459 = vmatpush1.bf16.msra.mxu0 0
      %1460 = vmatprep.subr.bf16.mxu0 0
      %1461 = vmatpush1.bf16.msra.mxu0 0
      %1462 = vmatprep.subr.bf16.mxu0 0
      %1463 = vmatpush1.bf16.msra.mxu0 0
      %1464 = vmatprep.mubr.bf16.mxu0 0
      %1465 = vmatmul.mubr.bf16.gmra.mrb[0].mxu0 %v1383
      %v1466 = vpop.f32.mrb[0].mxu0
      %v1467 = vadd.f32 %v1379, %v1466
      %v1468 = vpop.f32.mrb[0].mxu0
      %v1469 = vpop.f32.mrb[0].mxu0
      %v1470 = vpop.f32.mrb[0].mxu0
      %1471 = vdwg.mxu0
      %v1472 = vadd.f32 %v1328, %v1426
      %v1473 = vadd.f32 %v1330, %v1428
      %v1474 = vadd.f32 %v1369, %v1467
      %v1475 = vmax.f32 %v1472, 0.0
      %v1476 = vmax.f32 %v1473, 0.0
      %v1477 = vmax.f32 %v1474, 0.0
      %1479 = vrot.lane.b32.xlu0 %v1475, 126
      %v1480 = vpop.permute.xlu0 %1479
      %1482 = vrot.lane.b32.xlu0 %v1475, 124
      %v1483 = vpop.permute.xlu0 %1482
      %1485 = vrot.lane.b32.xlu0 %v1475, 122
      %v1486 = vpop.permute.xlu0 %1485
      %1488 = vrot.lane.b32.xlu0 %v1475, 120
      %v1489 = vpop.permute.xlu0 %1488
      %1491 = vrot.lane.b32.xlu0 %v1475, 118
      %v1492 = vpop.permute.xlu0 %1491
      %1494 = vrot.lane.b32.xlu0 %v1475, 116
      %v1495 = vpop.permute.xlu0 %1494
      %1498 = vrot.lane.b32.xlu0 %v1475, 114
      %v1499 = vpop.permute.xlu0 %1498
      %1500 = vrot.lane.b32.xlu0 %v1476, 114
      %v1501 = vpop.permute.xlu0 %1500
      %vm1502 = vcmask 932864
      %v1503 = vsel %vm1502, %v1499, %v1501
      %1505 = vrot.lane.b32.xlu0 %v1476, 112
      %v1506 = vpop.permute.xlu0 %1505
      %1508 = vrot.lane.b32.xlu0 %v1476, 110
      %v1509 = vpop.permute.xlu0 %1508
      %1511 = vrot.lane.b32.xlu0 %v1476, 108
      %v1512 = vpop.permute.xlu0 %1511
      %1514 = vrot.lane.b32.xlu0 %v1476, 106
      %v1515 = vpop.permute.xlu0 %1514
      %1517 = vrot.lane.b32.xlu0 %v1476, 104
      %v1518 = vpop.permute.xlu0 %1517
      %1520 = vrot.lane.b32.xlu0 %v1476, 102
      %v1521 = vpop.permute.xlu0 %1520
      %1524 = vrot.lane.b32.xlu0 %v1476, 100
      %v1525 = vpop.permute.xlu0 %1524
      %1526 = vrot.lane.b32.xlu0 %v1477, 100
      %v1527 = vpop.permute.xlu0 %1526
      %vm1528 = vcmask 818176
      %v1529 = vsel %vm1528, %v1525, %v1527
      %1531 = vrot.lane.b32.xlu0 %v1477, 98
      %v1532 = vpop.permute.xlu0 %1531
      %vm1534 = vcmask 130048
      %v1535 = vsel %vm1534, %v1475, %v1480
      %vm1536 = vcmask 261120
      %v1537 = vsel %vm1536, %v1535, %v1483
      %vm1538 = vcmask 392192
      %v1539 = vsel %vm1538, %v1537, %v1486
      %vm1540 = vcmask 523264
      %v1541 = vsel %vm1540, %v1539, %v1489
      %vm1542 = vcmask 654336
      %v1543 = vsel %vm1542, %v1541, %v1492
      %vm1544 = vcmask 785408
      %v1545 = vsel %vm1544, %v1543, %v1495
      %vm1546 = vcmask 916480
      %v1547 = vsel %vm1546, %v1545, %v1503
      %v1548 = vsel %vm1534, %v1506, %v1509
      %v1549 = vsel %vm1536, %v1548, %v1512
      %v1550 = vsel %vm1538, %v1549, %v1515
      %v1551 = vsel %vm1540, %v1550, %v1518
      %v1552 = vsel %vm1542, %v1551, %v1521
      %v1553 = vsel %vm1544, %v1552, %v1529
      %v1554 = vsel %vm1546, %v1553, %v1532
      %v1557 = vcombine.low %v1547, %v1554
      %1559 = vst [vmem:[%s489] sm:$0xff] %v1557
      %p1560 = scmp.lt.s32.totalorder %s27, 1
      %s1561 = scalar_select %p1560, %s27, 1
      %s1562 = smul.addr %s1561, 2
      %s1563 = smul.addr %s1562, 4
      %s1564 = scalar_lea.vmem %s14, %s1563
      // Predicated region
      $region77: #{up_block_forward.3} parent=75 // pred_check
        %p1565 = pneg %p349
      $region78: #{up_block_forward.3} parent=75 // pred_check_branch
        %1567 = sbr.rel (%p1565) target = $region80
      $region79: #{up_block_forward.3} parent=75 // pred_region
        _
      $region80: #{up_block_forward.3} parent=75 // pred_fallthru
        _
    $region76: #{up_block_forward.3} parent=5 // pred_fallthru
      _
    %p1568 = scmp.le.s32.totalorder 2, %s22
    // Predicated region
    $region81: #{up_block_forward.3} parent=5 // pred_check
      %p1569 = pneg %p1568
    $region82: #{up_block_forward.3} parent=5 // pred_check_branch
      %1571 = sbr.rel (%p1569) target = $region84
    $region83: #{up_block_forward.3} parent=5 // pred_region
      %s1572 = ssub.s32 %s22, 2
      // Predicated region
      $region85: #{up_block_forward.3} parent=83 // pred_check
        %p1573 = pneg %p355
      $region86: #{up_block_forward.3} parent=83 // pred_check_branch
        %1575 = sbr.rel (%p1573) target = $region88
      $region87: #{up_block_forward.3} parent=83 // pred_region
        %p1576 = scmp.lt.s32.totalorder %s28, 1
        %s1577 = scalar_select %p1576, %s28, 1
        %s1578 = smul.addr %s1577, 2
        %s1579 = smul.addr %s1578, 4
        %s1580 = scalar_lea.vmem %s14, %s1579
      $region88: #{up_block_forward.3} parent=83 // pred_fallthru
        _
    $region84: #{up_block_forward.3} parent=5 // pred_fallthru
      _
  $region6: #{up_block_forward.3} parent=0 // loop_footer
    %s26 = sadd.s32 1, %s22
  $region7: #{up_block_forward.3} parent=0 // loop_footer_branch
    %21 = sbr.rel target = $region3
  $region8: #{up_block_forward.3} parent=0 // loop_exit
    _

</llo_original>
